<compile_context>
chip_gen: v6e
topology: v6e:2x2x1
jax: 0.10.0
libtpu: 0.0.40
codegen_flags: <defaults>
</compile_context>

<pallas_src>
import jax
import jax.numpy as jnp
from jax.experimental import pallas as pl
from jax.experimental.pallas import tpu as pltpu

# ----------------------------- model config ---------------------------------
EMBEDDING_SIZE = 29              # config.embedding_size
INPUT_SIZE = EMBEDDING_SIZE + 1  # embedding + para_ratio
HIDDEN_SIZE = 32                 # config.hidden_size
OUTPUT_DIC_SIZE = 8              # classification output size
VOCAB_SIZE = 16
BATCH = 2
SEQ_LEN = 8


# ------------------------------ Pallas kernel -------------------------------
def bilstm_classify_kernel(
    xcat_ref,    # [T*B, 2*Din] f32   row t*B+b = [x[t,b] | x[T-1-t,b]]
    mask_ref,    # [T, B, 2H]   f32   fwd half: t<len[b]; bwd half: T-1-t<len[b]
    wih_ref,     # [2*Din, 8H]  f32   block-structured fused input weights
    whh_ref,     # [2H, 8H]     f32   block-diagonal fused hidden weights
    b_ref,       # [1, 8H]      f32   fused biases (b_ih + b_hh per direction)
    wemit_ref,   # [2H, K]      f32   emit weight^T, rows permuted for [h_f|h_b]
    bemit_ref,   # [1, K]       f32   emit bias
    out_ref,     # [B, K]       f32   emit scores
):
    T, B, H2 = mask_ref.shape            # H2 = 2H
    H = H2 // 2
    G = wih_ref.shape[1]                 # 8H

    # ---- hoisted input projection: one MXU matmul for all steps/directions ----
    gx = jnp.dot(xcat_ref[...], wih_ref[...],
                 preferred_element_type=jnp.float32) + b_ref[...]   # [T*B, 8H]
    gx = gx.reshape(T, B, G)

    mask = mask_ref[...]
    whh = whh_ref[...]

    h = jnp.zeros((B, H2), jnp.float32)  # [h_fwd | h_bwd]
    c = jnp.zeros((B, H2), jnp.float32)

    # ---- fused fwd+bwd recurrence, fully unrolled (T static & short) ----
    # Gate column layout: [i_f, i_b, f_f, f_b, o_f, o_b, g_f, g_b], each H wide.
    for s in range(T):
        gates = gx[s] + jnp.dot(h, whh, preferred_element_type=jnp.float32)  # [B, 8H]
        sig = jax.nn.sigmoid(gates[:, 0:6 * H])        # i / f / o for both dirs
        g = jnp.tanh(gates[:, 6 * H:8 * H])            # g for both dirs
        i_all = sig[:, 0:2 * H]
        f_all = sig[:, 2 * H:4 * H]
        o_all = sig[:, 4 * H:6 * H]
        c_new = f_all * c + i_all * g
        h_new = o_all * jnp.tanh(c_new)
        m = mask[s]                                    # [B, 2H]
        h = jnp.where(m > 0, h_new, h)                 # masked carry (pack_padded)
        c = jnp.where(m > 0, c_new, c)

    # ---- emit Linear on cat([hidden_bwd, hidden_fwd]) ----
    # wemit rows were permuted in the wrapper so h = [h_f | h_b] maps correctly.
    out_ref[...] = (jnp.dot(h, wemit_ref[...], preferred_element_type=jnp.float32)
                    + bemit_ref[...])


# --------------------------- wrapper helpers ---------------------------------
def _reorder_ifog(w):
    """PyTorch gate order (i, f, g, o) -> (i, f, o, g) along last axis."""
    H = HIDDEN_SIZE
    return jnp.concatenate(
        [w[..., 0:H], w[..., H:2 * H], w[..., 3 * H:4 * H], w[..., 2 * H:3 * H]],
        axis=-1)


def _interleave_dirs(wf, wb):
    """Two [..., 4H] (i,f,o,g) blocks -> [..., 8H] as [i_f,i_b,f_f,f_b,o_f,o_b,g_f,g_b]."""
    H = HIDDEN_SIZE
    blocks = []
    for gi in range(4):
        blocks.append(wf[..., gi * H:(gi + 1) * H])
        blocks.append(wb[..., gi * H:(gi + 1) * H])
    return jnp.concatenate(blocks, axis=-1)


# ------------------------------ wrapper --------------------------------------
@jax.jit
def bilstm_classify_forward(src, lengths, para_ratio, params):
    B, T = src.shape
    H = HIDDEN_SIZE
    K = OUTPUT_DIC_SIZE
    Din = INPUT_SIZE

    # --- glue: embedding lookup + para_ratio feature concat, time-major ---
    emb = params["emb_mat"][src]                                   # [B, T, E]
    ratio = jnp.broadcast_to(para_ratio[:, None, None], (B, T, 1))
    x_btd = jnp.concatenate([emb, ratio], axis=2).astype(jnp.float32)   # [B, T, Din]
    x_tbd = jnp.transpose(x_btd, (1, 0, 2))                        # [T, B, Din]
    # Fused-direction input: fwd half sees x[t], bwd half sees x[T-1-t].
    xcat = jnp.concatenate([x_tbd, x_tbd[::-1]], axis=-1)          # [T, B, 2Din]
    xcat2d = xcat.reshape(T * B, 2 * Din)

    # --- pack_padded_sequence emulation: per-direction validity masks ---
    mask_f = (jnp.arange(T)[:, None] < lengths[None, :]).astype(jnp.float32)  # [T, B]
    mask_b = mask_f[::-1]                                          # bwd step s -> time T-1-s
    mask2 = jnp.concatenate(
        [jnp.broadcast_to(mask_f[:, :, None], (T, B, H)),
         jnp.broadcast_to(mask_b[:, :, None], (T, B, H))], axis=-1)  # [T, B, 2H]

    # --- fused / reordered weights (tiny, constant-foldable under jit) ---
    wihf = _reorder_ifog(params["w_ih_f"])
    wihb = _reorder_ifog(params["w_ih_b"])
    whhf = _reorder_ifog(params["w_hh_f"])
    whhb = _reorder_ifog(params["w_hh_b"])
    zi = jnp.zeros_like(wihf)
    zh = jnp.zeros_like(whhf)
    w_ih_fused = jnp.concatenate([_interleave_dirs(wihf, zi),
                                  _interleave_dirs(zi, wihb)], axis=0)   # [2Din, 8H]
    w_hh_fused = jnp.concatenate([_interleave_dirs(whhf, zh),
                                  _interleave_dirs(zh, whhb)], axis=0)   # [2H, 8H]
    b_fused = _interleave_dirs(_reorder_ifog(params["b_f"]),
                               _reorder_ifog(params["b_b"]))             # [1, 8H]
    # emit: module computes cat([hidden_bwd, hidden_fwd]) @ w_emit; kernel h is
    # [h_fwd | h_bwd], so swap the two row-blocks of w_emit.
    w_emit_perm = jnp.concatenate([params["w_emit"][H:2 * H],
                                   params["w_emit"][0:H]], axis=0)       # [2H, K]

    vmem = pl.BlockSpec(memory_space=pltpu.MemorySpace.VMEM)
    return pl.pallas_call(
        bilstm_classify_kernel,
        out_shape=jax.ShapeDtypeStruct((B, K), jnp.float32),
        in_specs=[vmem] * 7,
        out_specs=vmem,
    )(xcat2d, mask2, w_ih_fused, w_hh_fused, b_fused, w_emit_perm, params["b_emit"])


# --------------------------- pure-JAX reference ------------------------------
def reference_forward(src, lengths, para_ratio, params):
    B, T = src.shape
    H = HIDDEN_SIZE
    emb = params["emb_mat"][src]
    ratio = jnp.broadcast_to(para_ratio[:, None, None], (B, T, 1))
    x = jnp.concatenate([emb, ratio], axis=2).astype(jnp.float32)   # [B, T, Din]
    mask = (jnp.arange(T)[None, :] < lengths[:, None]).astype(jnp.float32)  # [B, T]

    def step(x_t, h, c, w_ih, w_hh, b):
        g = x_t @ w_ih + h @ w_hh + b        # PyTorch gate order (i, f, g, o)
        i = jax.nn.sigmoid(g[:, 0:H])
        f = jax.nn.sigmoid(g[:, H:2 * H])
        gg = jnp.tanh(g[:, 2 * H:3 * H])
        o = jax.nn.sigmoid(g[:, 3 * H:4 * H])
        c_new = f * c + i * gg
        h_new = o * jnp.tanh(c_new)
        return h_new, c_new

    h = c = jnp.zeros((B, H), jnp.float32)
    for t in range(T):
        m = mask[:, t:t + 1]
        h_new, c_new = step(x[:, t], h, c, params["w_ih_f"], params["w_hh_f"], params["b_f"])
        h = m * h_new + (1 - m) * h
        c = m * c_new + (1 - m) * c
    h_f = h                                    # hidden[-2]: fwd final (t = len-1)
    h = c = jnp.zeros((B, H), jnp.float32)
    for t in range(T - 1, -1, -1):
        m = mask[:, t:t + 1]
        h_new, c_new = step(x[:, t], h, c, params["w_ih_b"], params["w_hh_b"], params["b_b"])
        h = m * h_new + (1 - m) * h
        c = m * c_new + (1 - m) * c
    h_b = h                                    # hidden[-1]: bwd final (t = 0)
    out = jnp.concatenate([h_b, h_f], axis=-1)  # cat([hidden[-1], hidden[-2]])
    return out @ params["w_emit"] + params["b_emit"]


# --------------------------------- main ---------------------------------------
if __name__ == "__main__":
    key = jax.random.PRNGKey(0)
    keys = jax.random.split(key, 11)

    H, Din, K = HIDDEN_SIZE, INPUT_SIZE, OUTPUT_DIC_SIZE
    params = {
        "emb_mat": jax.random.normal(keys[0], (VOCAB_SIZE, EMBEDDING_SIZE), jnp.float32) * 0.5,
        "w_ih_f": jax.random.normal(keys[1], (Din, 4 * H), jnp.float32) * 0.1,
        "w_hh_f": jax.random.normal(keys[2], (H, 4 * H), jnp.float32) * 0.1,
        "b_f": jax.random.normal(keys[3], (1, 4 * H), jnp.float32) * 0.05,
        "w_ih_b": jax.random.normal(keys[4], (Din, 4 * H), jnp.float32) * 0.1,
        "w_hh_b": jax.random.normal(keys[5], (H, 4 * H), jnp.float32) * 0.1,
        "b_b": jax.random.normal(keys[6], (1, 4 * H), jnp.float32) * 0.05,
        "w_emit": jax.random.normal(keys[7], (2 * H, K), jnp.float32) * 0.1,
        "b_emit": jax.random.normal(keys[8], (1, K), jnp.float32) * 0.05,
    }

    src = jax.random.randint(keys[9], (BATCH, SEQ_LEN), 0, VOCAB_SIZE, dtype=jnp.int32)
    lengths = jnp.array([SEQ_LEN, 5], dtype=jnp.int32)     # sorted descending (pack_padded)
    para_ratio = jax.random.uniform(keys[10], (BATCH,), jnp.float32)

    out = bilstm_classify_forward(src, lengths, para_ratio, params)
    out = jax.block_until_ready(out)

    ref = reference_forward(src, lengths, para_ratio, params)
    assert out.shape == (BATCH, OUTPUT_DIC_SIZE), out.shape
    assert jnp.allclose(out, ref, atol=1e-4, rtol=1e-4), float(jnp.max(jnp.abs(out - ref)))

    print("KERNEL_OK")
</pallas_src>

<mosaic_0001>
module attributes {stable_mosaic.version = 11 : i64} {
  func.func @bilstm_classify_kernel(%arg0: memref<16x60xf32, #tpu.memory_space<vmem>>, %arg1: memref<8x2x64xf32, #tpu.memory_space<vmem>>, %arg2: memref<60x256xf32, #tpu.memory_space<vmem>>, %arg3: memref<64x256xf32, #tpu.memory_space<vmem>>, %arg4: memref<1x256xf32, #tpu.memory_space<vmem>>, %arg5: memref<64x8xf32, #tpu.memory_space<vmem>>, %arg6: memref<1x8xf32, #tpu.memory_space<vmem>>, %arg7: memref<2x8xf32, #tpu.memory_space<vmem>>) attributes {dimension_semantics = [], scalar_prefetch = 0 : i64, scratch_operands = 0 : i64, tpu.core_type = #tpu.core_type<tc>} {
    %c0 = arith.constant 0 : index
    %c0_0 = arith.constant 0 : index
    %0 = vector.load %arg0[%c0, %c0_0] : memref<16x60xf32, #tpu.memory_space<vmem>>, vector<16x60xf32>
    %c0_1 = arith.constant 0 : index
    %c0_2 = arith.constant 0 : index
    %1 = vector.load %arg2[%c0_1, %c0_2] : memref<60x256xf32, #tpu.memory_space<vmem>>, vector<60x256xf32>
    %cst = arith.constant dense<0.000000e+00> : vector<16x256xf32>
    %2 = tpu.matmul %0, %1, %cst {dimension_numbers = #tpu.dot_dimension_numbers<[1], [0], [0], [1], [0, 0, 1, 1], [], []>} : vector<16x60xf32>, vector<60x256xf32>, vector<16x256xf32> -> vector<16x256xf32>
    %c0_3 = arith.constant 0 : index
    %c0_4 = arith.constant 0 : index
    %3 = vector.load %arg4[%c0_3, %c0_4] : memref<1x256xf32, #tpu.memory_space<vmem>>, vector<1x256xf32>
    %4 = vector.broadcast %3 : vector<1x256xf32> to vector<16x256xf32>
    %5 = arith.addf %2, %4 : vector<16x256xf32>
    %6 = vector.shape_cast %5 : vector<16x256xf32> to vector<8x2x256xf32>
    %c0_5 = arith.constant 0 : index
    %c0_6 = arith.constant 0 : index
    %c0_7 = arith.constant 0 : index
    %7 = vector.load %arg1[%c0_5, %c0_6, %c0_7] : memref<8x2x64xf32, #tpu.memory_space<vmem>>, vector<8x2x64xf32>
    %c0_8 = arith.constant 0 : index
    %c0_9 = arith.constant 0 : index
    %8 = vector.load %arg3[%c0_8, %c0_9] : memref<64x256xf32, #tpu.memory_space<vmem>>, vector<64x256xf32>
    %cst_10 = arith.constant 0.000000e+00 : f32
    %9 = vector.broadcast %cst_10 : f32 to vector<2x64xf32>
    %cst_11 = arith.constant 0.000000e+00 : f32
    %10 = vector.broadcast %cst_11 : f32 to vector<2x64xf32>
    %11 = vector.extract_strided_slice %6 {offsets = [0, 0, 0], sizes = [1, 2, 256], strides = [1, 1, 1]} : vector<8x2x256xf32> to vector<1x2x256xf32>
    %12 = vector.shape_cast %11 : vector<1x2x256xf32> to vector<2x256xf32>
    %cst_12 = arith.constant dense<0.000000e+00> : vector<2x256xf32>
    %13 = tpu.matmul %9, %8, %cst_12 {dimension_numbers = #tpu.dot_dimension_numbers<[1], [0], [0], [1], [0, 0, 1, 1], [], []>} : vector<2x64xf32>, vector<64x256xf32>, vector<2x256xf32> -> vector<2x256xf32>
    %14 = arith.addf %12, %13 : vector<2x256xf32>
    %15 = vector.extract_strided_slice %14 {offsets = [0, 0], sizes = [2, 192], strides = [1, 1]} : vector<2x256xf32> to vector<2x192xf32>
    %16 = arith.negf %15 : vector<2x192xf32>
    %17 = math.exp %16 : vector<2x192xf32>
    %cst_13 = arith.constant 1.000000e+00 : f32
    %18 = vector.broadcast %cst_13 : f32 to vector<2x192xf32>
    %19 = arith.addf %18, %17 : vector<2x192xf32>
    %20 = arith.divf %18, %19 : vector<2x192xf32>
    %21 = vector.extract_strided_slice %14 {offsets = [0, 192], sizes = [2, 64], strides = [1, 1]} : vector<2x256xf32> to vector<2x64xf32>
    %22 = math.tanh %21 : vector<2x64xf32>
    %23 = vector.extract_strided_slice %20 {offsets = [0, 0], sizes = [2, 64], strides = [1, 1]} : vector<2x192xf32> to vector<2x64xf32>
    %24 = vector.extract_strided_slice %20 {offsets = [0, 64], sizes = [2, 64], strides = [1, 1]} : vector<2x192xf32> to vector<2x64xf32>
    %25 = vector.extract_strided_slice %20 {offsets = [0, 128], sizes = [2, 64], strides = [1, 1]} : vector<2x192xf32> to vector<2x64xf32>
    %26 = arith.mulf %24, %10 : vector<2x64xf32>
    %27 = arith.mulf %23, %22 : vector<2x64xf32>
    %28 = arith.addf %26, %27 : vector<2x64xf32>
    %29 = math.tanh %28 : vector<2x64xf32>
    %30 = arith.mulf %25, %29 : vector<2x64xf32>
    %31 = vector.extract_strided_slice %7 {offsets = [0, 0, 0], sizes = [1, 2, 64], strides = [1, 1, 1]} : vector<8x2x64xf32> to vector<1x2x64xf32>
    %32 = vector.shape_cast %31 : vector<1x2x64xf32> to vector<2x64xf32>
    %cst_14 = arith.constant 0.000000e+00 : f32
    %33 = vector.broadcast %cst_14 : f32 to vector<2x64xf32>
    %34 = arith.cmpf ogt, %32, %33 : vector<2x64xf32>
    %35 = arith.select %34, %30, %9 : vector<2x64xi1>, vector<2x64xf32>
    %cst_15 = arith.constant 0.000000e+00 : f32
    %36 = vector.broadcast %cst_15 : f32 to vector<2x64xf32>
    %37 = arith.cmpf ogt, %32, %36 : vector<2x64xf32>
    %38 = arith.select %37, %28, %10 : vector<2x64xi1>, vector<2x64xf32>
    %39 = vector.extract_strided_slice %6 {offsets = [1, 0, 0], sizes = [1, 2, 256], strides = [1, 1, 1]} : vector<8x2x256xf32> to vector<1x2x256xf32>
    %40 = vector.shape_cast %39 : vector<1x2x256xf32> to vector<2x256xf32>
    %cst_16 = arith.constant dense<0.000000e+00> : vector<2x256xf32>
    %41 = tpu.matmul %35, %8, %cst_16 {dimension_numbers = #tpu.dot_dimension_numbers<[1], [0], [0], [1], [0, 0, 1, 1], [], []>} : vector<2x64xf32>, vector<64x256xf32>, vector<2x256xf32> -> vector<2x256xf32>
    %42 = arith.addf %40, %41 : vector<2x256xf32>
    %43 = vector.extract_strided_slice %42 {offsets = [0, 0], sizes = [2, 192], strides = [1, 1]} : vector<2x256xf32> to vector<2x192xf32>
    %44 = arith.negf %43 : vector<2x192xf32>
    %45 = math.exp %44 : vector<2x192xf32>
    %cst_17 = arith.constant 1.000000e+00 : f32
    %46 = vector.broadcast %cst_17 : f32 to vector<2x192xf32>
    %47 = arith.addf %46, %45 : vector<2x192xf32>
    %48 = arith.divf %46, %47 : vector<2x192xf32>
    %49 = vector.extract_strided_slice %42 {offsets = [0, 192], sizes = [2, 64], strides = [1, 1]} : vector<2x256xf32> to vector<2x64xf32>
    %50 = math.tanh %49 : vector<2x64xf32>
    %51 = vector.extract_strided_slice %48 {offsets = [0, 0], sizes = [2, 64], strides = [1, 1]} : vector<2x192xf32> to vector<2x64xf32>
    %52 = vector.extract_strided_slice %48 {offsets = [0, 64], sizes = [2, 64], strides = [1, 1]} : vector<2x192xf32> to vector<2x64xf32>
    %53 = vector.extract_strided_slice %48 {offsets = [0, 128], sizes = [2, 64], strides = [1, 1]} : vector<2x192xf32> to vector<2x64xf32>
    %54 = arith.mulf %52, %38 : vector<2x64xf32>
    %55 = arith.mulf %51, %50 : vector<2x64xf32>
    %56 = arith.addf %54, %55 : vector<2x64xf32>
    %57 = math.tanh %56 : vector<2x64xf32>
    %58 = arith.mulf %53, %57 : vector<2x64xf32>
    %59 = vector.extract_strided_slice %7 {offsets = [1, 0, 0], sizes = [1, 2, 64], strides = [1, 1, 1]} : vector<8x2x64xf32> to vector<1x2x64xf32>
    %60 = vector.shape_cast %59 : vector<1x2x64xf32> to vector<2x64xf32>
    %cst_18 = arith.constant 0.000000e+00 : f32
    %61 = vector.broadcast %cst_18 : f32 to vector<2x64xf32>
    %62 = arith.cmpf ogt, %60, %61 : vector<2x64xf32>
    %63 = arith.select %62, %58, %35 : vector<2x64xi1>, vector<2x64xf32>
    %cst_19 = arith.constant 0.000000e+00 : f32
    %64 = vector.broadcast %cst_19 : f32 to vector<2x64xf32>
    %65 = arith.cmpf ogt, %60, %64 : vector<2x64xf32>
    %66 = arith.select %65, %56, %38 : vector<2x64xi1>, vector<2x64xf32>
    %67 = vector.extract_strided_slice %6 {offsets = [2, 0, 0], sizes = [1, 2, 256], strides = [1, 1, 1]} : vector<8x2x256xf32> to vector<1x2x256xf32>
    %68 = vector.shape_cast %67 : vector<1x2x256xf32> to vector<2x256xf32>
    %cst_20 = arith.constant dense<0.000000e+00> : vector<2x256xf32>
    %69 = tpu.matmul %63, %8, %cst_20 {dimension_numbers = #tpu.dot_dimension_numbers<[1], [0], [0], [1], [0, 0, 1, 1], [], []>} : vector<2x64xf32>, vector<64x256xf32>, vector<2x256xf32> -> vector<2x256xf32>
    %70 = arith.addf %68, %69 : vector<2x256xf32>
    %71 = vector.extract_strided_slice %70 {offsets = [0, 0], sizes = [2, 192], strides = [1, 1]} : vector<2x256xf32> to vector<2x192xf32>
    %72 = arith.negf %71 : vector<2x192xf32>
    %73 = math.exp %72 : vector<2x192xf32>
    %cst_21 = arith.constant 1.000000e+00 : f32
    %74 = vector.broadcast %cst_21 : f32 to vector<2x192xf32>
    %75 = arith.addf %74, %73 : vector<2x192xf32>
    %76 = arith.divf %74, %75 : vector<2x192xf32>
    %77 = vector.extract_strided_slice %70 {offsets = [0, 192], sizes = [2, 64], strides = [1, 1]} : vector<2x256xf32> to vector<2x64xf32>
    %78 = math.tanh %77 : vector<2x64xf32>
    %79 = vector.extract_strided_slice %76 {offsets = [0, 0], sizes = [2, 64], strides = [1, 1]} : vector<2x192xf32> to vector<2x64xf32>
    %80 = vector.extract_strided_slice %76 {offsets = [0, 64], sizes = [2, 64], strides = [1, 1]} : vector<2x192xf32> to vector<2x64xf32>
    %81 = vector.extract_strided_slice %76 {offsets = [0, 128], sizes = [2, 64], strides = [1, 1]} : vector<2x192xf32> to vector<2x64xf32>
    %82 = arith.mulf %80, %66 : vector<2x64xf32>
    %83 = arith.mulf %79, %78 : vector<2x64xf32>
    %84 = arith.addf %82, %83 : vector<2x64xf32>
    %85 = math.tanh %84 : vector<2x64xf32>
    %86 = arith.mulf %81, %85 : vector<2x64xf32>
    %87 = vector.extract_strided_slice %7 {offsets = [2, 0, 0], sizes = [1, 2, 64], strides = [1, 1, 1]} : vector<8x2x64xf32> to vector<1x2x64xf32>
    %88 = vector.shape_cast %87 : vector<1x2x64xf32> to vector<2x64xf32>
    %cst_22 = arith.constant 0.000000e+00 : f32
    %89 = vector.broadcast %cst_22 : f32 to vector<2x64xf32>
    %90 = arith.cmpf ogt, %88, %89 : vector<2x64xf32>
    %91 = arith.select %90, %86, %63 : vector<2x64xi1>, vector<2x64xf32>
    %cst_23 = arith.constant 0.000000e+00 : f32
    %92 = vector.broadcast %cst_23 : f32 to vector<2x64xf32>
    %93 = arith.cmpf ogt, %88, %92 : vector<2x64xf32>
    %94 = arith.select %93, %84, %66 : vector<2x64xi1>, vector<2x64xf32>
    %95 = vector.extract_strided_slice %6 {offsets = [3, 0, 0], sizes = [1, 2, 256], strides = [1, 1, 1]} : vector<8x2x256xf32> to vector<1x2x256xf32>
    %96 = vector.shape_cast %95 : vector<1x2x256xf32> to vector<2x256xf32>
    %cst_24 = arith.constant dense<0.000000e+00> : vector<2x256xf32>
    %97 = tpu.matmul %91, %8, %cst_24 {dimension_numbers = #tpu.dot_dimension_numbers<[1], [0], [0], [1], [0, 0, 1, 1], [], []>} : vector<2x64xf32>, vector<64x256xf32>, vector<2x256xf32> -> vector<2x256xf32>
    %98 = arith.addf %96, %97 : vector<2x256xf32>
    %99 = vector.extract_strided_slice %98 {offsets = [0, 0], sizes = [2, 192], strides = [1, 1]} : vector<2x256xf32> to vector<2x192xf32>
    %100 = arith.negf %99 : vector<2x192xf32>
    %101 = math.exp %100 : vector<2x192xf32>
    %cst_25 = arith.constant 1.000000e+00 : f32
    %102 = vector.broadcast %cst_25 : f32 to vector<2x192xf32>
    %103 = arith.addf %102, %101 : vector<2x192xf32>
    %104 = arith.divf %102, %103 : vector<2x192xf32>
    %105 = vector.extract_strided_slice %98 {offsets = [0, 192], sizes = [2, 64], strides = [1, 1]} : vector<2x256xf32> to vector<2x64xf32>
    %106 = math.tanh %105 : vector<2x64xf32>
    %107 = vector.extract_strided_slice %104 {offsets = [0, 0], sizes = [2, 64], strides = [1, 1]} : vector<2x192xf32> to vector<2x64xf32>
    %108 = vector.extract_strided_slice %104 {offsets = [0, 64], sizes = [2, 64], strides = [1, 1]} : vector<2x192xf32> to vector<2x64xf32>
    %109 = vector.extract_strided_slice %104 {offsets = [0, 128], sizes = [2, 64], strides = [1, 1]} : vector<2x192xf32> to vector<2x64xf32>
    %110 = arith.mulf %108, %94 : vector<2x64xf32>
    %111 = arith.mulf %107, %106 : vector<2x64xf32>
    %112 = arith.addf %110, %111 : vector<2x64xf32>
    %113 = math.tanh %112 : vector<2x64xf32>
    %114 = arith.mulf %109, %113 : vector<2x64xf32>
    %115 = vector.extract_strided_slice %7 {offsets = [3, 0, 0], sizes = [1, 2, 64], strides = [1, 1, 1]} : vector<8x2x64xf32> to vector<1x2x64xf32>
    %116 = vector.shape_cast %115 : vector<1x2x64xf32> to vector<2x64xf32>
    %cst_26 = arith.constant 0.000000e+00 : f32
    %117 = vector.broadcast %cst_26 : f32 to vector<2x64xf32>
    %118 = arith.cmpf ogt, %116, %117 : vector<2x64xf32>
    %119 = arith.select %118, %114, %91 : vector<2x64xi1>, vector<2x64xf32>
    %cst_27 = arith.constant 0.000000e+00 : f32
    %120 = vector.broadcast %cst_27 : f32 to vector<2x64xf32>
    %121 = arith.cmpf ogt, %116, %120 : vector<2x64xf32>
    %122 = arith.select %121, %112, %94 : vector<2x64xi1>, vector<2x64xf32>
    %123 = vector.extract_strided_slice %6 {offsets = [4, 0, 0], sizes = [1, 2, 256], strides = [1, 1, 1]} : vector<8x2x256xf32> to vector<1x2x256xf32>
    %124 = vector.shape_cast %123 : vector<1x2x256xf32> to vector<2x256xf32>
    %cst_28 = arith.constant dense<0.000000e+00> : vector<2x256xf32>
    %125 = tpu.matmul %119, %8, %cst_28 {dimension_numbers = #tpu.dot_dimension_numbers<[1], [0], [0], [1], [0, 0, 1, 1], [], []>} : vector<2x64xf32>, vector<64x256xf32>, vector<2x256xf32> -> vector<2x256xf32>
    %126 = arith.addf %124, %125 : vector<2x256xf32>
    %127 = vector.extract_strided_slice %126 {offsets = [0, 0], sizes = [2, 192], strides = [1, 1]} : vector<2x256xf32> to vector<2x192xf32>
    %128 = arith.negf %127 : vector<2x192xf32>
    %129 = math.exp %128 : vector<2x192xf32>
    %cst_29 = arith.constant 1.000000e+00 : f32
    %130 = vector.broadcast %cst_29 : f32 to vector<2x192xf32>
    %131 = arith.addf %130, %129 : vector<2x192xf32>
    %132 = arith.divf %130, %131 : vector<2x192xf32>
    %133 = vector.extract_strided_slice %126 {offsets = [0, 192], sizes = [2, 64], strides = [1, 1]} : vector<2x256xf32> to vector<2x64xf32>
    %134 = math.tanh %133 : vector<2x64xf32>
    %135 = vector.extract_strided_slice %132 {offsets = [0, 0], sizes = [2, 64], strides = [1, 1]} : vector<2x192xf32> to vector<2x64xf32>
    %136 = vector.extract_strided_slice %132 {offsets = [0, 64], sizes = [2, 64], strides = [1, 1]} : vector<2x192xf32> to vector<2x64xf32>
    %137 = vector.extract_strided_slice %132 {offsets = [0, 128], sizes = [2, 64], strides = [1, 1]} : vector<2x192xf32> to vector<2x64xf32>
    %138 = arith.mulf %136, %122 : vector<2x64xf32>
    %139 = arith.mulf %135, %134 : vector<2x64xf32>
    %140 = arith.addf %138, %139 : vector<2x64xf32>
    %141 = math.tanh %140 : vector<2x64xf32>
    %142 = arith.mulf %137, %141 : vector<2x64xf32>
    %143 = vector.extract_strided_slice %7 {offsets = [4, 0, 0], sizes = [1, 2, 64], strides = [1, 1, 1]} : vector<8x2x64xf32> to vector<1x2x64xf32>
    %144 = vector.shape_cast %143 : vector<1x2x64xf32> to vector<2x64xf32>
    %cst_30 = arith.constant 0.000000e+00 : f32
    %145 = vector.broadcast %cst_30 : f32 to vector<2x64xf32>
    %146 = arith.cmpf ogt, %144, %145 : vector<2x64xf32>
    %147 = arith.select %146, %142, %119 : vector<2x64xi1>, vector<2x64xf32>
    %cst_31 = arith.constant 0.000000e+00 : f32
    %148 = vector.broadcast %cst_31 : f32 to vector<2x64xf32>
    %149 = arith.cmpf ogt, %144, %148 : vector<2x64xf32>
    %150 = arith.select %149, %140, %122 : vector<2x64xi1>, vector<2x64xf32>
    %151 = vector.extract_strided_slice %6 {offsets = [5, 0, 0], sizes = [1, 2, 256], strides = [1, 1, 1]} : vector<8x2x256xf32> to vector<1x2x256xf32>
    %152 = vector.shape_cast %151 : vector<1x2x256xf32> to vector<2x256xf32>
    %cst_32 = arith.constant dense<0.000000e+00> : vector<2x256xf32>
    %153 = tpu.matmul %147, %8, %cst_32 {dimension_numbers = #tpu.dot_dimension_numbers<[1], [0], [0], [1], [0, 0, 1, 1], [], []>} : vector<2x64xf32>, vector<64x256xf32>, vector<2x256xf32> -> vector<2x256xf32>
    %154 = arith.addf %152, %153 : vector<2x256xf32>
    %155 = vector.extract_strided_slice %154 {offsets = [0, 0], sizes = [2, 192], strides = [1, 1]} : vector<2x256xf32> to vector<2x192xf32>
    %156 = arith.negf %155 : vector<2x192xf32>
    %157 = math.exp %156 : vector<2x192xf32>
    %cst_33 = arith.constant 1.000000e+00 : f32
    %158 = vector.broadcast %cst_33 : f32 to vector<2x192xf32>
    %159 = arith.addf %158, %157 : vector<2x192xf32>
    %160 = arith.divf %158, %159 : vector<2x192xf32>
    %161 = vector.extract_strided_slice %154 {offsets = [0, 192], sizes = [2, 64], strides = [1, 1]} : vector<2x256xf32> to vector<2x64xf32>
    %162 = math.tanh %161 : vector<2x64xf32>
    %163 = vector.extract_strided_slice %160 {offsets = [0, 0], sizes = [2, 64], strides = [1, 1]} : vector<2x192xf32> to vector<2x64xf32>
    %164 = vector.extract_strided_slice %160 {offsets = [0, 64], sizes = [2, 64], strides = [1, 1]} : vector<2x192xf32> to vector<2x64xf32>
    %165 = vector.extract_strided_slice %160 {offsets = [0, 128], sizes = [2, 64], strides = [1, 1]} : vector<2x192xf32> to vector<2x64xf32>
    %166 = arith.mulf %164, %150 : vector<2x64xf32>
    %167 = arith.mulf %163, %162 : vector<2x64xf32>
    %168 = arith.addf %166, %167 : vector<2x64xf32>
    %169 = math.tanh %168 : vector<2x64xf32>
    %170 = arith.mulf %165, %169 : vector<2x64xf32>
    %171 = vector.extract_strided_slice %7 {offsets = [5, 0, 0], sizes = [1, 2, 64], strides = [1, 1, 1]} : vector<8x2x64xf32> to vector<1x2x64xf32>
    %172 = vector.shape_cast %171 : vector<1x2x64xf32> to vector<2x64xf32>
    %cst_34 = arith.constant 0.000000e+00 : f32
    %173 = vector.broadcast %cst_34 : f32 to vector<2x64xf32>
    %174 = arith.cmpf ogt, %172, %173 : vector<2x64xf32>
    %175 = arith.select %174, %170, %147 : vector<2x64xi1>, vector<2x64xf32>
    %cst_35 = arith.constant 0.000000e+00 : f32
    %176 = vector.broadcast %cst_35 : f32 to vector<2x64xf32>
    %177 = arith.cmpf ogt, %172, %176 : vector<2x64xf32>
    %178 = arith.select %177, %168, %150 : vector<2x64xi1>, vector<2x64xf32>
    %179 = vector.extract_strided_slice %6 {offsets = [6, 0, 0], sizes = [1, 2, 256], strides = [1, 1, 1]} : vector<8x2x256xf32> to vector<1x2x256xf32>
    %180 = vector.shape_cast %179 : vector<1x2x256xf32> to vector<2x256xf32>
    %cst_36 = arith.constant dense<0.000000e+00> : vector<2x256xf32>
    %181 = tpu.matmul %175, %8, %cst_36 {dimension_numbers = #tpu.dot_dimension_numbers<[1], [0], [0], [1], [0, 0, 1, 1], [], []>} : vector<2x64xf32>, vector<64x256xf32>, vector<2x256xf32> -> vector<2x256xf32>
    %182 = arith.addf %180, %181 : vector<2x256xf32>
    %183 = vector.extract_strided_slice %182 {offsets = [0, 0], sizes = [2, 192], strides = [1, 1]} : vector<2x256xf32> to vector<2x192xf32>
    %184 = arith.negf %183 : vector<2x192xf32>
    %185 = math.exp %184 : vector<2x192xf32>
    %cst_37 = arith.constant 1.000000e+00 : f32
    %186 = vector.broadcast %cst_37 : f32 to vector<2x192xf32>
    %187 = arith.addf %186, %185 : vector<2x192xf32>
    %188 = arith.divf %186, %187 : vector<2x192xf32>
    %189 = vector.extract_strided_slice %182 {offsets = [0, 192], sizes = [2, 64], strides = [1, 1]} : vector<2x256xf32> to vector<2x64xf32>
    %190 = math.tanh %189 : vector<2x64xf32>
    %191 = vector.extract_strided_slice %188 {offsets = [0, 0], sizes = [2, 64], strides = [1, 1]} : vector<2x192xf32> to vector<2x64xf32>
    %192 = vector.extract_strided_slice %188 {offsets = [0, 64], sizes = [2, 64], strides = [1, 1]} : vector<2x192xf32> to vector<2x64xf32>
    %193 = vector.extract_strided_slice %188 {offsets = [0, 128], sizes = [2, 64], strides = [1, 1]} : vector<2x192xf32> to vector<2x64xf32>
    %194 = arith.mulf %192, %178 : vector<2x64xf32>
    %195 = arith.mulf %191, %190 : vector<2x64xf32>
    %196 = arith.addf %194, %195 : vector<2x64xf32>
    %197 = math.tanh %196 : vector<2x64xf32>
    %198 = arith.mulf %193, %197 : vector<2x64xf32>
    %199 = vector.extract_strided_slice %7 {offsets = [6, 0, 0], sizes = [1, 2, 64], strides = [1, 1, 1]} : vector<8x2x64xf32> to vector<1x2x64xf32>
    %200 = vector.shape_cast %199 : vector<1x2x64xf32> to vector<2x64xf32>
    %cst_38 = arith.constant 0.000000e+00 : f32
    %201 = vector.broadcast %cst_38 : f32 to vector<2x64xf32>
    %202 = arith.cmpf ogt, %200, %201 : vector<2x64xf32>
    %203 = arith.select %202, %198, %175 : vector<2x64xi1>, vector<2x64xf32>
    %cst_39 = arith.constant 0.000000e+00 : f32
    %204 = vector.broadcast %cst_39 : f32 to vector<2x64xf32>
    %205 = arith.cmpf ogt, %200, %204 : vector<2x64xf32>
    %206 = arith.select %205, %196, %178 : vector<2x64xi1>, vector<2x64xf32>
    %207 = vector.extract_strided_slice %6 {offsets = [7, 0, 0], sizes = [1, 2, 256], strides = [1, 1, 1]} : vector<8x2x256xf32> to vector<1x2x256xf32>
    %208 = vector.shape_cast %207 : vector<1x2x256xf32> to vector<2x256xf32>
    %cst_40 = arith.constant dense<0.000000e+00> : vector<2x256xf32>
    %209 = tpu.matmul %203, %8, %cst_40 {dimension_numbers = #tpu.dot_dimension_numbers<[1], [0], [0], [1], [0, 0, 1, 1], [], []>} : vector<2x64xf32>, vector<64x256xf32>, vector<2x256xf32> -> vector<2x256xf32>
    %210 = arith.addf %208, %209 : vector<2x256xf32>
    %211 = vector.extract_strided_slice %210 {offsets = [0, 0], sizes = [2, 192], strides = [1, 1]} : vector<2x256xf32> to vector<2x192xf32>
    %212 = arith.negf %211 : vector<2x192xf32>
    %213 = math.exp %212 : vector<2x192xf32>
    %cst_41 = arith.constant 1.000000e+00 : f32
    %214 = vector.broadcast %cst_41 : f32 to vector<2x192xf32>
    %215 = arith.addf %214, %213 : vector<2x192xf32>
    %216 = arith.divf %214, %215 : vector<2x192xf32>
    %217 = vector.extract_strided_slice %210 {offsets = [0, 192], sizes = [2, 64], strides = [1, 1]} : vector<2x256xf32> to vector<2x64xf32>
    %218 = math.tanh %217 : vector<2x64xf32>
    %219 = vector.extract_strided_slice %216 {offsets = [0, 0], sizes = [2, 64], strides = [1, 1]} : vector<2x192xf32> to vector<2x64xf32>
    %220 = vector.extract_strided_slice %216 {offsets = [0, 64], sizes = [2, 64], strides = [1, 1]} : vector<2x192xf32> to vector<2x64xf32>
    %221 = vector.extract_strided_slice %216 {offsets = [0, 128], sizes = [2, 64], strides = [1, 1]} : vector<2x192xf32> to vector<2x64xf32>
    %222 = arith.mulf %220, %206 : vector<2x64xf32>
    %223 = arith.mulf %219, %218 : vector<2x64xf32>
    %224 = arith.addf %222, %223 : vector<2x64xf32>
    %225 = math.tanh %224 : vector<2x64xf32>
    %226 = arith.mulf %221, %225 : vector<2x64xf32>
    %227 = vector.extract_strided_slice %7 {offsets = [7, 0, 0], sizes = [1, 2, 64], strides = [1, 1, 1]} : vector<8x2x64xf32> to vector<1x2x64xf32>
    %228 = vector.shape_cast %227 : vector<1x2x64xf32> to vector<2x64xf32>
    %cst_42 = arith.constant 0.000000e+00 : f32
    %229 = vector.broadcast %cst_42 : f32 to vector<2x64xf32>
    %230 = arith.cmpf ogt, %228, %229 : vector<2x64xf32>
    %231 = arith.select %230, %226, %203 : vector<2x64xi1>, vector<2x64xf32>
    %c0_43 = arith.constant 0 : index
    %c0_44 = arith.constant 0 : index
    %232 = vector.load %arg5[%c0_43, %c0_44] : memref<64x8xf32, #tpu.memory_space<vmem>>, vector<64x8xf32>
    %cst_45 = arith.constant dense<0.000000e+00> : vector<2x8xf32>
    %233 = tpu.matmul %231, %232, %cst_45 {dimension_numbers = #tpu.dot_dimension_numbers<[1], [0], [0], [1], [0, 0, 1, 1], [], []>} : vector<2x64xf32>, vector<64x8xf32>, vector<2x8xf32> -> vector<2x8xf32>
    %c0_46 = arith.constant 0 : index
    %c0_47 = arith.constant 0 : index
    %234 = vector.load %arg6[%c0_46, %c0_47] : memref<1x8xf32, #tpu.memory_space<vmem>>, vector<1x8xf32>
    %235 = vector.broadcast %234 : vector<1x8xf32> to vector<2x8xf32>
    %236 = arith.addf %233, %235 : vector<2x8xf32>
    %c0_48 = arith.constant 0 : index
    %c0_49 = arith.constant 0 : index
    %237 = vector.load %arg7[%c0_48, %c0_49] : memref<2x8xf32, #tpu.memory_space<vmem>>, vector<2x8xf32>
    tpu.vector_store %arg7[%c0_48, %c0_49], %236 {strides = array<i32>} : memref<2x8xf32, #tpu.memory_space<vmem>>, vector<2x8xf32>,
    return
  }
}

</mosaic_0001>

<llo_original>
// kernel: bilstm_classify_forward.1
$region0: #{bilstm_classify_forward.1}
  #allocation0 [shape = 'u32[]', space=smem, size = 0x4, offset = 0x4, fixed_abs, tag = 'smem constant byte address 0x4 - core index']
  #allocation1 [shape = 'u32[144,128]{1,0:T(1,128)}', space=vmem, size = 0x12000, scoped, tag = 'internal scratch']
  %s0 = inlined_call_operand.vmem [shape: f32[16,60], index: 0, kind: input, shape index: {}]
  %s1 = inlined_call_operand.vmem [shape: f32[8,2,64], index: 1, kind: input, shape index: {}]
  %s2 = inlined_call_operand.vmem [shape: f32[60,256], index: 2, kind: input, shape index: {}]
  %s3 = inlined_call_operand.vmem [shape: f32[64,256], index: 3, kind: input, shape index: {}]
  %s4 = inlined_call_operand.vmem [shape: f32[1,256], index: 4, kind: input, shape index: {}]
  %s5 = inlined_call_operand.vmem [shape: f32[64,8], index: 5, kind: input, shape index: {}]
  %s6 = inlined_call_operand.vmem [shape: f32[1,8], index: 6, kind: input, shape index: {}]
  %s7 = inlined_call_operand.hbm [shape: f32[2,8], index: 7, kind: output, shape index: {}]
  %s8 = sld [smem:[#allocation0]]
  $region38: #{bilstm_classify_forward.1} parent=0
    _
  %s10 = ssub.s32 1, %s8
  %s11 = scalar_select 0, %s10, %s8
  $region1: #{bilstm_classify_forward.1} parent=0
    #allocation2 [shape = 'u8[1024]{0}', space=vmem, size = 0x400, scoped, tag = 'output window, operand 0, single buffered']
    #allocation3 [shape = 's32[1]{0}', space=sflag, size = 0x4, scoped, tag = 'scoped memory for bilstm_classify_forward.1']
    %12 = vsyncpa [#allocation3], 0
    // Predicated region
    $region2: #{bilstm_classify_forward.1} parent=1 // pred_check
      _
    $region3: #{bilstm_classify_forward.1} parent=1 // pred_check_branch
      %14 = sbr.rel (0) target = $region5
    $region4: #{bilstm_classify_forward.1} parent=1 // pred_region
      _
    $region5: #{bilstm_classify_forward.1} parent=1 // pred_fallthru
      _
    // Predicated region
    $region6: #{bilstm_classify_forward.1} parent=1 // pred_check
      _
    $region7: #{bilstm_classify_forward.1} parent=1 // pred_check_branch
      %16 = sbr.rel (0) target = $region9
    $region8: #{bilstm_classify_forward.1} parent=1 // pred_region
      _
    $region9: #{bilstm_classify_forward.1} parent=1 // pred_fallthru
      _
    // Predicated region
    $region10: #{bilstm_classify_forward.1} parent=1 // pred_check
      _
    $region11: #{bilstm_classify_forward.1} parent=1 // pred_check_branch
      %18 = sbr.rel (0) target = $region13
    $region12: #{bilstm_classify_forward.1} parent=1 // pred_region
      _
    $region13: #{bilstm_classify_forward.1} parent=1 // pred_fallthru
      _
    // Predicated region
    $region14: #{bilstm_classify_forward.1} parent=1 // pred_check
      _
    $region15: #{bilstm_classify_forward.1} parent=1 // pred_check_branch
      %20 = sbr.rel (0) target = $region17
    $region16: #{bilstm_classify_forward.1} parent=1 // pred_region
      _
    $region17: #{bilstm_classify_forward.1} parent=1 // pred_fallthru
      _
    // Predicated region
    $region18: #{bilstm_classify_forward.1} parent=1 // pred_check
      _
    $region19: #{bilstm_classify_forward.1} parent=1 // pred_check_branch
      %22 = sbr.rel (0) target = $region21
    $region20: #{bilstm_classify_forward.1} parent=1 // pred_region
      _
    $region21: #{bilstm_classify_forward.1} parent=1 // pred_fallthru
      _
    // Predicated region
    $region22: #{bilstm_classify_forward.1} parent=1 // pred_check
      _
    $region23: #{bilstm_classify_forward.1} parent=1 // pred_check_branch
      %24 = sbr.rel (0) target = $region25
    $region24: #{bilstm_classify_forward.1} parent=1 // pred_region
      _
    $region25: #{bilstm_classify_forward.1} parent=1 // pred_fallthru
      _
    // Predicated region
    $region26: #{bilstm_classify_forward.1} parent=1 // pred_check
      _
    $region27: #{bilstm_classify_forward.1} parent=1 // pred_check_branch
      %26 = sbr.rel (0) target = $region29
    $region28: #{bilstm_classify_forward.1} parent=1 // pred_region
      _
    $region29: #{bilstm_classify_forward.1} parent=1 // pred_fallthru
      _
    %v27 = vld [vmem:[%s0] sm:$0xff]
    %v28 = vld [vmem:[%s0 + $0x8] sm:$0xff]
    %v29 = vld [vmem:[%s2] sm:$0xff]
    %v30 = vld [vmem:[%s2 + $0x8] sm:$0xff]
    %v31 = vld [vmem:[%s2 + $0x10] sm:$0xff]
    %v32 = vld [vmem:[%s2 + $0x18] sm:$0xff]
    %v33 = vld [vmem:[%s2 + $0x20] sm:$0xff]
    %v34 = vld [vmem:[%s2 + $0x28] sm:$0xff]
    %v35 = vld [vmem:[%s2 + $0x30] sm:$0xff]
    %v36 = vld [vmem:[%s2 + $0x38] sm:$0xff]
    %v37 = vld [vmem:[%s2 + $0x40] sm:$0xff]
    %v38 = vld [vmem:[%s2 + $0x48] sm:$0xff]
    %v39 = vld [vmem:[%s2 + $0x50] sm:$0xff]
    %v40 = vld [vmem:[%s2 + $0x58] sm:$0xff]
    %v41 = vld [vmem:[%s2 + $0x60] sm:$0xff]
    %v42 = vld [vmem:[%s2 + $0x68] sm:$0xff]
    %v43 = vld [vmem:[%s2 + $0x70] sm:$0xf]
    %v44 = vld [vmem:[%s2 + $0x78] sm:$0xf]
    %v45 = vld [vmem:[%s4] sm:$0x3]
    %v47 = vlaneseq
    %v48 = vshrl.u32 %v47, 7
    %v49 = vsub.s32 0, %v48
    %v50 = vrot.slane %v45, %v49
    %v51 = vlaneseq
    %v52 = vshrl.u32 %v51, 7
    %v53 = vsub.s32 1, %v52
    %v54 = vrot.slane %v45, %v53
    %vm57 = vcmask 490496
    %v59 = vsel %vm57, %v27, 0
    %v62 = vsel %vm57, %v28, 0
    %vm64 = vcmask 1043456
    %v66 = vsel %vm64, %v43, 0
    %v69 = vsel %vm64, %v44, 0
    %71 = vmatprep.subr.mxu0 0.0
    %72 = vmatpush1.msra.mxu0 0.0
    %73 = vmatprep.subr.mxu0 0.0
    %74 = vmatpush1.msra.mxu0 0.0
    %75 = vmatprep.subr.mxu0 0.0
    %76 = vmatpush1.msra.mxu0 0.0
    %77 = vmatprep.subr.mxu0 0.0
    %78 = vmatpush1.msra.mxu0 0.0
    %79 = vmatprep.subr.mxu0 0.0
    %80 = vmatpush1.msra.mxu0 0.0
    %81 = vmatprep.subr.mxu0 0.0
    %82 = vmatpush1.msra.mxu0 0.0
    %83 = vmatprep.subr.mxu0 0.0
    %84 = vmatpush1.msra.mxu0 0.0
    %85 = vmatprep.subr.mxu0 0.0
    %86 = vmatpush1.msra.mxu0 0.0
    %87 = vmatprep.subr.mxu0 %v69
    %88 = vmatpush1.msra.mxu0 %v66
    %89 = vmatprep.subr.mxu0 %v42
    %90 = vmatpush1.msra.mxu0 %v41
    %91 = vmatprep.subr.mxu0 %v40
    %92 = vmatpush1.msra.mxu0 %v39
    %93 = vmatprep.subr.mxu0 %v38
    %94 = vmatpush1.msra.mxu0 %v37
    %95 = vmatprep.subr.mxu0 %v36
    %96 = vmatpush1.msra.mxu0 %v35
    %97 = vmatprep.subr.mxu0 %v34
    %98 = vmatpush1.msra.mxu0 %v33
    %99 = vmatprep.subr.mxu0 %v32
    %100 = vmatpush1.msra.mxu0 %v31
    %101 = vmatprep.subr.mxu0 %v30
    %102 = vmatpush1.msra.mxu0 %v29
    %103 = vmatprep.subr.mxu0 0.0
    %104 = vmatpush2.msra.mxu0 0.0
    %105 = vmatprep.subr.mxu0 0.0
    %106 = vmatpush2.msra.mxu0 0.0
    %107 = vmatprep.subr.mxu0 0.0
    %108 = vmatpush2.msra.mxu0 0.0
    %109 = vmatprep.subr.mxu0 0.0
    %110 = vmatpush2.msra.mxu0 0.0
    %111 = vmatprep.subr.mxu0 0.0
    %112 = vmatpush2.msra.mxu0 0.0
    %113 = vmatprep.subr.mxu0 0.0
    %114 = vmatpush2.msra.mxu0 0.0
    %115 = vmatprep.subr.mxu0 0.0
    %116 = vmatpush2.msra.mxu0 0.0
    %117 = vmatprep.subr.mxu0 0.0
    %118 = vmatpush2.msra.mxu0 0.0
    %119 = vmatprep.subr.mxu0 0.0
    %120 = vmatpush2.msra.mxu0 0.0
    %121 = vmatprep.subr.mxu0 0.0
    %122 = vmatpush2.msra.mxu0 0.0
    %123 = vmatprep.subr.mxu0 0.0
    %124 = vmatpush2.msra.mxu0 0.0
    %125 = vmatprep.subr.mxu0 0.0
    %126 = vmatpush2.msra.mxu0 0.0
    %127 = vmatprep.subr.mxu0 0.0
    %128 = vmatpush2.msra.mxu0 0.0
    %129 = vmatprep.subr.mxu0 0.0
    %130 = vmatpush2.msra.mxu0 0.0
    %131 = vmatprep.subr.mxu0 0.0
    %132 = vmatpush2.msra.mxu0 0.0
    %133 = vmatprep.subr.mxu0 0.0
    %134 = vmatpush2.msra.mxu0 0.0
    %135 = vmatprep.mubr.f32.mxu0 0.0
    %136 = vmatmul.mubr.f32.gmra.mxu0 %v59
    %v137 = vpop.f32.mrf.mxu0
    %v138 = vadd.f32 %v50, %v137
    %v139 = vpop.f32.mrf.mxu0
    %v140 = vadd.f32 %v54, %v139
    %141 = vmatprep.mubr.f32.mxu0 0.0
    %142 = vmatmul.mubr.f32.gmra.mxu0 %v62
    %v143 = vpop.f32.mrf.mxu0
    %v144 = vadd.f32 %v50, %v143
    %v145 = vpop.f32.mrf.mxu0
    %v146 = vadd.f32 %v54, %v145
    %147 = vdwg.mxu0
    %v152 = vcombine.low %v138, %v140
    %v153 = vcombine.high %v138, %v140
    %v155 = vunpack.c.l.s4 1983009808
    %v156 = vunpack.c.0.s8 %v155
    %v157 = vlaneseq
    %v158 = vshrl.u32 %v157, 7
    %v159 = vsub.s32 %v156, %v158
    %v160 = vrot.slane %v152, %v159
    %v162 = vunpack.c.l.s4 1983009808
    %v163 = vunpack.c.0.s8 %v162
    %v164 = vlaneseq
    %v165 = vshrl.u32 %v164, 7
    %v166 = vsub.s32 %v163, %v165
    %v167 = vrot.slane %v153, %v166
    %v168 = vcombine.high %v160, %v160
    %v169 = vcombine.high %v167, %v167
    %v170 = vcombine.low %v144, %v146
    %v171 = vcombine.high %v144, %v146
    %v173 = vunpack.c.l.s4 1983009808
    %v174 = vunpack.c.0.s8 %v173
    %v175 = vlaneseq
    %v176 = vshrl.u32 %v175, 7
    %v177 = vsub.s32 %v174, %v176
    %v178 = vrot.slane %v170, %v177
    %v180 = vunpack.c.l.s4 1983009808
    %v181 = vunpack.c.0.s8 %v180
    %v182 = vlaneseq
    %v183 = vshrl.u32 %v182, 7
    %v184 = vsub.s32 %v181, %v183
    %v185 = vrot.slane %v171, %v184
    %v186 = vcombine.high %v178, %v178
    %v187 = vcombine.high %v185, %v185
    %v196 = vld [vmem:[%s1] sm:$0x3]
    %v197 = vld [vmem:[%s1 + $0x2] sm:$0x3]
    %v198 = vld [vmem:[%s1 + $0x4] sm:$0x3]
    %v199 = vld [vmem:[%s1 + $0x6] sm:$0x3]
    %v200 = vld [vmem:[%s1 + $0x8] sm:$0x3]
    %v201 = vld [vmem:[%s1 + $0xa] sm:$0x3]
    %v202 = vld [vmem:[%s1 + $0xc] sm:$0x3]
    %v203 = vld [vmem:[%s1 + $0xe] sm:$0x3]
    %v204 = vld [vmem:[%s3] sm:$0xff]
    %v205 = vld [vmem:[%s3 + $0x8] sm:$0xff]
    %v206 = vld [vmem:[%s3 + $0x10] sm:$0xff]
    %v207 = vld [vmem:[%s3 + $0x18] sm:$0xff]
    %v208 = vld [vmem:[%s3 + $0x20] sm:$0xff]
    %v209 = vld [vmem:[%s3 + $0x28] sm:$0xff]
    %v210 = vld [vmem:[%s3 + $0x30] sm:$0xff]
    %v211 = vld [vmem:[%s3 + $0x38] sm:$0xff]
    %v212 = vld [vmem:[%s3 + $0x40] sm:$0xff]
    %v213 = vld [vmem:[%s3 + $0x48] sm:$0xff]
    %v214 = vld [vmem:[%s3 + $0x50] sm:$0xff]
    %v215 = vld [vmem:[%s3 + $0x58] sm:$0xff]
    %v216 = vld [vmem:[%s3 + $0x60] sm:$0xff]
    %v217 = vld [vmem:[%s3 + $0x68] sm:$0xff]
    %v218 = vld [vmem:[%s3 + $0x70] sm:$0xff]
    %v219 = vld [vmem:[%s3 + $0x78] sm:$0xff]
    %vm220 = vcmask 523264
    %v222 = vsel %vm220, 0.0, 0
    %224 = vmatprep.subr.mxu0 0.0
    %225 = vmatpush1.msra.mxu0 0.0
    %226 = vmatprep.subr.mxu0 0.0
    %227 = vmatpush1.msra.mxu0 0.0
    %228 = vmatprep.subr.mxu0 0.0
    %229 = vmatpush1.msra.mxu0 0.0
    %230 = vmatprep.subr.mxu0 0.0
    %231 = vmatpush1.msra.mxu0 0.0
    %232 = vmatprep.subr.mxu0 0.0
    %233 = vmatpush1.msra.mxu0 0.0
    %234 = vmatprep.subr.mxu0 0.0
    %235 = vmatpush1.msra.mxu0 0.0
    %236 = vmatprep.subr.mxu0 0.0
    %237 = vmatpush1.msra.mxu0 0.0
    %238 = vmatprep.subr.mxu0 0.0
    %239 = vmatpush1.msra.mxu0 0.0
    %240 = vmatprep.subr.mxu0 %v219
    %241 = vmatpush1.msra.mxu0 %v218
    %242 = vmatprep.subr.mxu0 %v217
    %243 = vmatpush1.msra.mxu0 %v216
    %244 = vmatprep.subr.mxu0 %v215
    %245 = vmatpush1.msra.mxu0 %v214
    %246 = vmatprep.subr.mxu0 %v213
    %247 = vmatpush1.msra.mxu0 %v212
    %248 = vmatprep.subr.mxu0 %v211
    %249 = vmatpush1.msra.mxu0 %v210
    %250 = vmatprep.subr.mxu0 %v209
    %251 = vmatpush1.msra.mxu0 %v208
    %252 = vmatprep.subr.mxu0 %v207
    %253 = vmatpush1.msra.mxu0 %v206
    %254 = vmatprep.subr.mxu0 %v205
    %255 = vmatpush1.msra.mxu0 %v204
    %256 = vmatprep.subr.mxu0 0.0
    %257 = vmatpush2.msra.mxu0 0.0
    %258 = vmatprep.subr.mxu0 0.0
    %259 = vmatpush2.msra.mxu0 0.0
    %260 = vmatprep.subr.mxu0 0.0
    %261 = vmatpush2.msra.mxu0 0.0
    %262 = vmatprep.subr.mxu0 0.0
    %263 = vmatpush2.msra.mxu0 0.0
    %264 = vmatprep.subr.mxu0 0.0
    %265 = vmatpush2.msra.mxu0 0.0
    %266 = vmatprep.subr.mxu0 0.0
    %267 = vmatpush2.msra.mxu0 0.0
    %268 = vmatprep.subr.mxu0 0.0
    %269 = vmatpush2.msra.mxu0 0.0
    %270 = vmatprep.subr.mxu0 0.0
    %271 = vmatpush2.msra.mxu0 0.0
    %272 = vmatprep.subr.mxu0 0.0
    %273 = vmatpush2.msra.mxu0 0.0
    %274 = vmatprep.subr.mxu0 0.0
    %275 = vmatpush2.msra.mxu0 0.0
    %276 = vmatprep.subr.mxu0 0.0
    %277 = vmatpush2.msra.mxu0 0.0
    %278 = vmatprep.subr.mxu0 0.0
    %279 = vmatpush2.msra.mxu0 0.0
    %280 = vmatprep.subr.mxu0 0.0
    %281 = vmatpush2.msra.mxu0 0.0
    %282 = vmatprep.subr.mxu0 0.0
    %283 = vmatpush2.msra.mxu0 0.0
    %284 = vmatprep.subr.mxu0 0.0
    %285 = vmatpush2.msra.mxu0 0.0
    %286 = vmatprep.subr.mxu0 0.0
    %287 = vmatpush2.msra.mxu0 0.0
    %288 = vmatprep.mubr.f32.mxu0 0.0
    %289 = vmatmul.mubr.f32.gmra.mxu0 %v222
    %v290 = vpop.f32.mrf.mxu0
    %v291 = vadd.f32 0.0, %v290
    %v292 = vpop.f32.mrf.mxu0
    %v293 = vadd.f32 0.0, %v292
    %294 = vdwg.mxu0
    %v297 = vcombine.low %v291, %v293
    %v299 = vunpack.c.l.s4 1983009808
    %v300 = vunpack.c.0.s8 %v299
    %v301 = vlaneseq
    %v302 = vshrl.u32 %v301, 7
    %v303 = vsub.s32 %v300, %v302
    %v304 = vrot.slane %v297, %v303
    %v306 = vadd.f32 %v160, %v304
    %v307 = vxor.u32 %v306, 2147483648
    %v308 = vmul.f32 %v307, 1.442695
    %v309 = vpow.pop %v308
    %v310 = vadd.f32 %v309, 1.0
    %v311 = vrcp.pop %v310
    %v312 = vmul.f32 1.0, %v311
    %314 = vrot.lane.b32.xlu0 %v306, 64
    %v315 = vpop.permute.xlu0 %314
    %v316 = vrot.slane %v315, 2
    %v318 = vtanh.pop %v316
    %v319 = vmul.f32 %v312, 0.0
    %v320 = vmul.f32 %v312, %v318
    %322 = vrot.lane.b32.xlu0 %v320, 64
    %v323 = vpop.permute.xlu0 %322
    %v325 = vadd.f32 %v319, %v323
    %v326 = vtanh.pop %v325
    %v328 = vrot.slane %v312, 2
    %331 = vrot.lane.b32.xlu0 %v326, 64
    %v332 = vpop.permute.xlu0 %331
    %v334 = vmul.f32 %v328, %v332
    %vm335 = vcmp.gt.f32.partialorder %v196, 0.0
    %v336 = vsel %vm335, %v334, 0.0
    %v339 = vunpack.c.l.s4 1983009808
    %v340 = vunpack.c.0.s8 %v339
    %v341 = vlaneseq
    %v342 = vshrl.u32 %v341, 7
    %v343 = vsub.s32 %v340, %v342
    %v344 = vrot.slane %v325, %v343
    %345 = vrot.lane.b32.xlu0 %v344, 64
    %v346 = vpop.permute.xlu0 %345
    %v348 = vsel %vm335, %v346, 0.0
    %v350 = vsel %vm220, %v336, 0
    %352 = vmatprep.subr.mxu0 0.0
    %353 = vmatpush1.msra.mxu0 0.0
    %354 = vmatprep.subr.mxu0 0.0
    %355 = vmatpush1.msra.mxu0 0.0
    %356 = vmatprep.subr.mxu0 0.0
    %357 = vmatpush1.msra.mxu0 0.0
    %358 = vmatprep.subr.mxu0 0.0
    %359 = vmatpush1.msra.mxu0 0.0
    %360 = vmatprep.subr.mxu0 0.0
    %361 = vmatpush1.msra.mxu0 0.0
    %362 = vmatprep.subr.mxu0 0.0
    %363 = vmatpush1.msra.mxu0 0.0
    %364 = vmatprep.subr.mxu0 0.0
    %365 = vmatpush1.msra.mxu0 0.0
    %366 = vmatprep.subr.mxu0 0.0
    %367 = vmatpush1.msra.mxu0 0.0
    %368 = vmatprep.subr.mxu0 %v219
    %369 = vmatpush1.msra.mxu0 %v218
    %370 = vmatprep.subr.mxu0 %v217
    %371 = vmatpush1.msra.mxu0 %v216
    %372 = vmatprep.subr.mxu0 %v215
    %373 = vmatpush1.msra.mxu0 %v214
    %374 = vmatprep.subr.mxu0 %v213
    %375 = vmatpush1.msra.mxu0 %v212
    %376 = vmatprep.subr.mxu0 %v211
    %377 = vmatpush1.msra.mxu0 %v210
    %378 = vmatprep.subr.mxu0 %v209
    %379 = vmatpush1.msra.mxu0 %v208
    %380 = vmatprep.subr.mxu0 %v207
    %381 = vmatpush1.msra.mxu0 %v206
    %382 = vmatprep.subr.mxu0 %v205
    %383 = vmatpush1.msra.mxu0 %v204
    %384 = vmatprep.subr.mxu0 0.0
    %385 = vmatpush2.msra.mxu0 0.0
    %386 = vmatprep.subr.mxu0 0.0
    %387 = vmatpush2.msra.mxu0 0.0
    %388 = vmatprep.subr.mxu0 0.0
    %389 = vmatpush2.msra.mxu0 0.0
    %390 = vmatprep.subr.mxu0 0.0
    %391 = vmatpush2.msra.mxu0 0.0
    %392 = vmatprep.subr.mxu0 0.0
    %393 = vmatpush2.msra.mxu0 0.0
    %394 = vmatprep.subr.mxu0 0.0
    %395 = vmatpush2.msra.mxu0 0.0
    %396 = vmatprep.subr.mxu0 0.0
    %397 = vmatpush2.msra.mxu0 0.0
    %398 = vmatprep.subr.mxu0 0.0
    %399 = vmatpush2.msra.mxu0 0.0
    %400 = vmatprep.subr.mxu0 0.0
    %401 = vmatpush2.msra.mxu0 0.0
    %402 = vmatprep.subr.mxu0 0.0
    %403 = vmatpush2.msra.mxu0 0.0
    %404 = vmatprep.subr.mxu0 0.0
    %405 = vmatpush2.msra.mxu0 0.0
    %406 = vmatprep.subr.mxu0 0.0
    %407 = vmatpush2.msra.mxu0 0.0
    %408 = vmatprep.subr.mxu0 0.0
    %409 = vmatpush2.msra.mxu0 0.0
    %410 = vmatprep.subr.mxu0 0.0
    %411 = vmatpush2.msra.mxu0 0.0
    %412 = vmatprep.subr.mxu0 0.0
    %413 = vmatpush2.msra.mxu0 0.0
    %414 = vmatprep.subr.mxu0 0.0
    %415 = vmatpush2.msra.mxu0 0.0
    %416 = vmatprep.mubr.f32.mxu0 0.0
    %417 = vmatmul.mubr.f32.gmra.mxu0 %v350
    %v418 = vpop.f32.mrf.mxu0
    %v419 = vadd.f32 0.0, %v418
    %v420 = vpop.f32.mrf.mxu0
    %v421 = vadd.f32 0.0, %v420
    %422 = vdwg.mxu0
    %v425 = vcombine.low %v419, %v421
    %v427 = vunpack.c.l.s4 1983009808
    %v428 = vunpack.c.0.s8 %v427
    %v429 = vlaneseq
    %v430 = vshrl.u32 %v429, 7
    %v431 = vsub.s32 %v428, %v430
    %v432 = vrot.slane %v425, %v431
    %v434 = vadd.f32 %v168, %v432
    %v435 = vxor.u32 %v434, 2147483648
    %v436 = vmul.f32 %v435, 1.442695
    %v437 = vpow.pop %v436
    %v438 = vadd.f32 %v437, 1.0
    %v439 = vrcp.pop %v438
    %v440 = vmul.f32 1.0, %v439
    %442 = vrot.lane.b32.xlu0 %v434, 64
    %v443 = vpop.permute.xlu0 %442
    %v444 = vrot.slane %v443, 2
    %v446 = vtanh.pop %v444
    %v449 = vunpack.c.l.s4 1983009808
    %v450 = vunpack.c.0.s8 %v449
    %v451 = vlaneseq
    %v452 = vshrl.u32 %v451, 7
    %v453 = vsub.s32 %v450, %v452
    %v454 = vrot.slane %v348, %v453
    %455 = vrot.lane.b32.xlu0 %v454, 64
    %v456 = vpop.permute.xlu0 %455
    %v458 = vmul.f32 %v440, %v456
    %v459 = vmul.f32 %v440, %v446
    %461 = vrot.lane.b32.xlu0 %v459, 64
    %v462 = vpop.permute.xlu0 %461
    %v464 = vadd.f32 %v458, %v462
    %v465 = vtanh.pop %v464
    %v467 = vrot.slane %v440, 2
    %470 = vrot.lane.b32.xlu0 %v465, 64
    %v471 = vpop.permute.xlu0 %470
    %v473 = vmul.f32 %v467, %v471
    %vm474 = vcmp.gt.f32.partialorder %v197, 0.0
    %v475 = vsel %vm474, %v473, %v336
    %v478 = vunpack.c.l.s4 1983009808
    %v479 = vunpack.c.0.s8 %v478
    %v480 = vlaneseq
    %v481 = vshrl.u32 %v480, 7
    %v482 = vsub.s32 %v479, %v481
    %v483 = vrot.slane %v464, %v482
    %484 = vrot.lane.b32.xlu0 %v483, 64
    %v485 = vpop.permute.xlu0 %484
    %v487 = vsel %vm474, %v485, %v348
    %v489 = vsel %vm220, %v475, 0
    %491 = vmatprep.subr.mxu0 0.0
    %492 = vmatpush1.msra.mxu0 0.0
    %493 = vmatprep.subr.mxu0 0.0
    %494 = vmatpush1.msra.mxu0 0.0
    %495 = vmatprep.subr.mxu0 0.0
    %496 = vmatpush1.msra.mxu0 0.0
    %497 = vmatprep.subr.mxu0 0.0
    %498 = vmatpush1.msra.mxu0 0.0
    %499 = vmatprep.subr.mxu0 0.0
    %500 = vmatpush1.msra.mxu0 0.0
    %501 = vmatprep.subr.mxu0 0.0
    %502 = vmatpush1.msra.mxu0 0.0
    %503 = vmatprep.subr.mxu0 0.0
    %504 = vmatpush1.msra.mxu0 0.0
    %505 = vmatprep.subr.mxu0 0.0
    %506 = vmatpush1.msra.mxu0 0.0
    %507 = vmatprep.subr.mxu0 %v219
    %508 = vmatpush1.msra.mxu0 %v218
    %509 = vmatprep.subr.mxu0 %v217
    %510 = vmatpush1.msra.mxu0 %v216
    %511 = vmatprep.subr.mxu0 %v215
    %512 = vmatpush1.msra.mxu0 %v214
    %513 = vmatprep.subr.mxu0 %v213
    %514 = vmatpush1.msra.mxu0 %v212
    %515 = vmatprep.subr.mxu0 %v211
    %516 = vmatpush1.msra.mxu0 %v210
    %517 = vmatprep.subr.mxu0 %v209
    %518 = vmatpush1.msra.mxu0 %v208
    %519 = vmatprep.subr.mxu0 %v207
    %520 = vmatpush1.msra.mxu0 %v206
    %521 = vmatprep.subr.mxu0 %v205
    %522 = vmatpush1.msra.mxu0 %v204
    %523 = vmatprep.subr.mxu0 0.0
    %524 = vmatpush2.msra.mxu0 0.0
    %525 = vmatprep.subr.mxu0 0.0
    %526 = vmatpush2.msra.mxu0 0.0
    %527 = vmatprep.subr.mxu0 0.0
    %528 = vmatpush2.msra.mxu0 0.0
    %529 = vmatprep.subr.mxu0 0.0
    %530 = vmatpush2.msra.mxu0 0.0
    %531 = vmatprep.subr.mxu0 0.0
    %532 = vmatpush2.msra.mxu0 0.0
    %533 = vmatprep.subr.mxu0 0.0
    %534 = vmatpush2.msra.mxu0 0.0
    %535 = vmatprep.subr.mxu0 0.0
    %536 = vmatpush2.msra.mxu0 0.0
    %537 = vmatprep.subr.mxu0 0.0
    %538 = vmatpush2.msra.mxu0 0.0
    %539 = vmatprep.subr.mxu0 0.0
    %540 = vmatpush2.msra.mxu0 0.0
    %541 = vmatprep.subr.mxu0 0.0
    %542 = vmatpush2.msra.mxu0 0.0
    %543 = vmatprep.subr.mxu0 0.0
    %544 = vmatpush2.msra.mxu0 0.0
    %545 = vmatprep.subr.mxu0 0.0
    %546 = vmatpush2.msra.mxu0 0.0
    %547 = vmatprep.subr.mxu0 0.0
    %548 = vmatpush2.msra.mxu0 0.0
    %549 = vmatprep.subr.mxu0 0.0
    %550 = vmatpush2.msra.mxu0 0.0
    %551 = vmatprep.subr.mxu0 0.0
    %552 = vmatpush2.msra.mxu0 0.0
    %553 = vmatprep.subr.mxu0 0.0
    %554 = vmatpush2.msra.mxu0 0.0
    %555 = vmatprep.mubr.f32.mxu0 0.0
    %556 = vmatmul.mubr.f32.gmra.mxu0 %v489
    %v557 = vpop.f32.mrf.mxu0
    %v558 = vadd.f32 0.0, %v557
    %v559 = vpop.f32.mrf.mxu0
    %v560 = vadd.f32 0.0, %v559
    %561 = vdwg.mxu0
    %v564 = vcombine.low %v558, %v560
    %v566 = vunpack.c.l.s4 1983009808
    %v567 = vunpack.c.0.s8 %v566
    %v568 = vlaneseq
    %v569 = vshrl.u32 %v568, 7
    %v570 = vsub.s32 %v567, %v569
    %v571 = vrot.slane %v564, %v570
    %v573 = vadd.f32 %v167, %v571
    %v574 = vxor.u32 %v573, 2147483648
    %v575 = vmul.f32 %v574, 1.442695
    %v576 = vpow.pop %v575
    %v577 = vadd.f32 %v576, 1.0
    %v578 = vrcp.pop %v577
    %v579 = vmul.f32 1.0, %v578
    %581 = vrot.lane.b32.xlu0 %v573, 64
    %v582 = vpop.permute.xlu0 %581
    %v583 = vrot.slane %v582, 2
    %v585 = vtanh.pop %v583
    %v588 = vunpack.c.l.s4 1983009808
    %v589 = vunpack.c.0.s8 %v588
    %v590 = vlaneseq
    %v591 = vshrl.u32 %v590, 7
    %v592 = vsub.s32 %v589, %v591
    %v593 = vrot.slane %v487, %v592
    %594 = vrot.lane.b32.xlu0 %v593, 64
    %v595 = vpop.permute.xlu0 %594
    %v597 = vmul.f32 %v579, %v595
    %v598 = vmul.f32 %v579, %v585
    %600 = vrot.lane.b32.xlu0 %v598, 64
    %v601 = vpop.permute.xlu0 %600
    %v603 = vadd.f32 %v597, %v601
    %v604 = vtanh.pop %v603
    %v606 = vrot.slane %v579, 2
    %609 = vrot.lane.b32.xlu0 %v604, 64
    %v610 = vpop.permute.xlu0 %609
    %v612 = vmul.f32 %v606, %v610
    %vm613 = vcmp.gt.f32.partialorder %v198, 0.0
    %v614 = vsel %vm613, %v612, %v475
    %v617 = vunpack.c.l.s4 1983009808
    %v618 = vunpack.c.0.s8 %v617
    %v619 = vlaneseq
    %v620 = vshrl.u32 %v619, 7
    %v621 = vsub.s32 %v618, %v620
    %v622 = vrot.slane %v603, %v621
    %623 = vrot.lane.b32.xlu0 %v622, 64
    %v624 = vpop.permute.xlu0 %623
    %v626 = vsel %vm613, %v624, %v487
    %v628 = vsel %vm220, %v614, 0
    %630 = vmatprep.subr.mxu0 0.0
    %631 = vmatpush1.msra.mxu0 0.0
    %632 = vmatprep.subr.mxu0 0.0
    %633 = vmatpush1.msra.mxu0 0.0
    %634 = vmatprep.subr.mxu0 0.0
    %635 = vmatpush1.msra.mxu0 0.0
    %636 = vmatprep.subr.mxu0 0.0
    %637 = vmatpush1.msra.mxu0 0.0
    %638 = vmatprep.subr.mxu0 0.0
    %639 = vmatpush1.msra.mxu0 0.0
    %640 = vmatprep.subr.mxu0 0.0
    %641 = vmatpush1.msra.mxu0 0.0
    %642 = vmatprep.subr.mxu0 0.0
    %643 = vmatpush1.msra.mxu0 0.0
    %644 = vmatprep.subr.mxu0 0.0
    %645 = vmatpush1.msra.mxu0 0.0
    %646 = vmatprep.subr.mxu0 %v219
    %647 = vmatpush1.msra.mxu0 %v218
    %648 = vmatprep.subr.mxu0 %v217
    %649 = vmatpush1.msra.mxu0 %v216
    %650 = vmatprep.subr.mxu0 %v215
    %651 = vmatpush1.msra.mxu0 %v214
    %652 = vmatprep.subr.mxu0 %v213
    %653 = vmatpush1.msra.mxu0 %v212
    %654 = vmatprep.subr.mxu0 %v211
    %655 = vmatpush1.msra.mxu0 %v210
    %656 = vmatprep.subr.mxu0 %v209
    %657 = vmatpush1.msra.mxu0 %v208
    %658 = vmatprep.subr.mxu0 %v207
    %659 = vmatpush1.msra.mxu0 %v206
    %660 = vmatprep.subr.mxu0 %v205
    %661 = vmatpush1.msra.mxu0 %v204
    %662 = vmatprep.subr.mxu0 0.0
    %663 = vmatpush2.msra.mxu0 0.0
    %664 = vmatprep.subr.mxu0 0.0
    %665 = vmatpush2.msra.mxu0 0.0
    %666 = vmatprep.subr.mxu0 0.0
    %667 = vmatpush2.msra.mxu0 0.0
    %668 = vmatprep.subr.mxu0 0.0
    %669 = vmatpush2.msra.mxu0 0.0
    %670 = vmatprep.subr.mxu0 0.0
    %671 = vmatpush2.msra.mxu0 0.0
    %672 = vmatprep.subr.mxu0 0.0
    %673 = vmatpush2.msra.mxu0 0.0
    %674 = vmatprep.subr.mxu0 0.0
    %675 = vmatpush2.msra.mxu0 0.0
    %676 = vmatprep.subr.mxu0 0.0
    %677 = vmatpush2.msra.mxu0 0.0
    %678 = vmatprep.subr.mxu0 0.0
    %679 = vmatpush2.msra.mxu0 0.0
    %680 = vmatprep.subr.mxu0 0.0
    %681 = vmatpush2.msra.mxu0 0.0
    %682 = vmatprep.subr.mxu0 0.0
    %683 = vmatpush2.msra.mxu0 0.0
    %684 = vmatprep.subr.mxu0 0.0
    %685 = vmatpush2.msra.mxu0 0.0
    %686 = vmatprep.subr.mxu0 0.0
    %687 = vmatpush2.msra.mxu0 0.0
    %688 = vmatprep.subr.mxu0 0.0
    %689 = vmatpush2.msra.mxu0 0.0
    %690 = vmatprep.subr.mxu0 0.0
    %691 = vmatpush2.msra.mxu0 0.0
    %692 = vmatprep.subr.mxu0 0.0
    %693 = vmatpush2.msra.mxu0 0.0
    %694 = vmatprep.mubr.f32.mxu0 0.0
    %695 = vmatmul.mubr.f32.gmra.mxu0 %v628
    %v696 = vpop.f32.mrf.mxu0
    %v697 = vadd.f32 0.0, %v696
    %v698 = vpop.f32.mrf.mxu0
    %v699 = vadd.f32 0.0, %v698
    %700 = vdwg.mxu0
    %v703 = vcombine.low %v697, %v699
    %v705 = vunpack.c.l.s4 1983009808
    %v706 = vunpack.c.0.s8 %v705
    %v707 = vlaneseq
    %v708 = vshrl.u32 %v707, 7
    %v709 = vsub.s32 %v706, %v708
    %v710 = vrot.slane %v703, %v709
    %v712 = vadd.f32 %v169, %v710
    %v713 = vxor.u32 %v712, 2147483648
    %v714 = vmul.f32 %v713, 1.442695
    %v715 = vpow.pop %v714
    %v716 = vadd.f32 %v715, 1.0
    %v717 = vrcp.pop %v716
    %v718 = vmul.f32 1.0, %v717
    %720 = vrot.lane.b32.xlu0 %v712, 64
    %v721 = vpop.permute.xlu0 %720
    %v722 = vrot.slane %v721, 2
    %v724 = vtanh.pop %v722
    %v727 = vunpack.c.l.s4 1983009808
    %v728 = vunpack.c.0.s8 %v727
    %v729 = vlaneseq
    %v730 = vshrl.u32 %v729, 7
    %v731 = vsub.s32 %v728, %v730
    %v732 = vrot.slane %v626, %v731
    %733 = vrot.lane.b32.xlu0 %v732, 64
    %v734 = vpop.permute.xlu0 %733
    %v736 = vmul.f32 %v718, %v734
    %v737 = vmul.f32 %v718, %v724
    %739 = vrot.lane.b32.xlu0 %v737, 64
    %v740 = vpop.permute.xlu0 %739
    %v742 = vadd.f32 %v736, %v740
    %v743 = vtanh.pop %v742
    %v745 = vrot.slane %v718, 2
    %748 = vrot.lane.b32.xlu0 %v743, 64
    %v749 = vpop.permute.xlu0 %748
    %v751 = vmul.f32 %v745, %v749
    %vm752 = vcmp.gt.f32.partialorder %v199, 0.0
    %v753 = vsel %vm752, %v751, %v614
    %v756 = vunpack.c.l.s4 1983009808
    %v757 = vunpack.c.0.s8 %v756
    %v758 = vlaneseq
    %v759 = vshrl.u32 %v758, 7
    %v760 = vsub.s32 %v757, %v759
    %v761 = vrot.slane %v742, %v760
    %762 = vrot.lane.b32.xlu0 %v761, 64
    %v763 = vpop.permute.xlu0 %762
    %v765 = vsel %vm752, %v763, %v626
    %v767 = vsel %vm220, %v753, 0
    %769 = vmatprep.subr.mxu0 0.0
    %770 = vmatpush1.msra.mxu0 0.0
    %771 = vmatprep.subr.mxu0 0.0
    %772 = vmatpush1.msra.mxu0 0.0
    %773 = vmatprep.subr.mxu0 0.0
    %774 = vmatpush1.msra.mxu0 0.0
    %775 = vmatprep.subr.mxu0 0.0
    %776 = vmatpush1.msra.mxu0 0.0
    %777 = vmatprep.subr.mxu0 0.0
    %778 = vmatpush1.msra.mxu0 0.0
    %779 = vmatprep.subr.mxu0 0.0
    %780 = vmatpush1.msra.mxu0 0.0
    %781 = vmatprep.subr.mxu0 0.0
    %782 = vmatpush1.msra.mxu0 0.0
    %783 = vmatprep.subr.mxu0 0.0
    %784 = vmatpush1.msra.mxu0 0.0
    %785 = vmatprep.subr.mxu0 %v219
    %786 = vmatpush1.msra.mxu0 %v218
    %787 = vmatprep.subr.mxu0 %v217
    %788 = vmatpush1.msra.mxu0 %v216
    %789 = vmatprep.subr.mxu0 %v215
    %790 = vmatpush1.msra.mxu0 %v214
    %791 = vmatprep.subr.mxu0 %v213
    %792 = vmatpush1.msra.mxu0 %v212
    %793 = vmatprep.subr.mxu0 %v211
    %794 = vmatpush1.msra.mxu0 %v210
    %795 = vmatprep.subr.mxu0 %v209
    %796 = vmatpush1.msra.mxu0 %v208
    %797 = vmatprep.subr.mxu0 %v207
    %798 = vmatpush1.msra.mxu0 %v206
    %799 = vmatprep.subr.mxu0 %v205
    %800 = vmatpush1.msra.mxu0 %v204
    %801 = vmatprep.subr.mxu0 0.0
    %802 = vmatpush2.msra.mxu0 0.0
    %803 = vmatprep.subr.mxu0 0.0
    %804 = vmatpush2.msra.mxu0 0.0
    %805 = vmatprep.subr.mxu0 0.0
    %806 = vmatpush2.msra.mxu0 0.0
    %807 = vmatprep.subr.mxu0 0.0
    %808 = vmatpush2.msra.mxu0 0.0
    %809 = vmatprep.subr.mxu0 0.0
    %810 = vmatpush2.msra.mxu0 0.0
    %811 = vmatprep.subr.mxu0 0.0
    %812 = vmatpush2.msra.mxu0 0.0
    %813 = vmatprep.subr.mxu0 0.0
    %814 = vmatpush2.msra.mxu0 0.0
    %815 = vmatprep.subr.mxu0 0.0
    %816 = vmatpush2.msra.mxu0 0.0
    %817 = vmatprep.subr.mxu0 0.0
    %818 = vmatpush2.msra.mxu0 0.0
    %819 = vmatprep.subr.mxu0 0.0
    %820 = vmatpush2.msra.mxu0 0.0
    %821 = vmatprep.subr.mxu0 0.0
    %822 = vmatpush2.msra.mxu0 0.0
    %823 = vmatprep.subr.mxu0 0.0
    %824 = vmatpush2.msra.mxu0 0.0
    %825 = vmatprep.subr.mxu0 0.0
    %826 = vmatpush2.msra.mxu0 0.0
    %827 = vmatprep.subr.mxu0 0.0
    %828 = vmatpush2.msra.mxu0 0.0
    %829 = vmatprep.subr.mxu0 0.0
    %830 = vmatpush2.msra.mxu0 0.0
    %831 = vmatprep.subr.mxu0 0.0
    %832 = vmatpush2.msra.mxu0 0.0
    %833 = vmatprep.mubr.f32.mxu0 0.0
    %834 = vmatmul.mubr.f32.gmra.mxu0 %v767
    %v835 = vpop.f32.mrf.mxu0
    %v836 = vadd.f32 0.0, %v835
    %v837 = vpop.f32.mrf.mxu0
    %v838 = vadd.f32 0.0, %v837
    %839 = vdwg.mxu0
    %v842 = vcombine.low %v836, %v838
    %v844 = vunpack.c.l.s4 1983009808
    %v845 = vunpack.c.0.s8 %v844
    %v846 = vlaneseq
    %v847 = vshrl.u32 %v846, 7
    %v848 = vsub.s32 %v845, %v847
    %v849 = vrot.slane %v842, %v848
    %v851 = vadd.f32 %v178, %v849
    %v852 = vxor.u32 %v851, 2147483648
    %v853 = vmul.f32 %v852, 1.442695
    %v854 = vpow.pop %v853
    %v855 = vadd.f32 %v854, 1.0
    %v856 = vrcp.pop %v855
    %v857 = vmul.f32 1.0, %v856
    %859 = vrot.lane.b32.xlu0 %v851, 64
    %v860 = vpop.permute.xlu0 %859
    %v861 = vrot.slane %v860, 2
    %v863 = vtanh.pop %v861
    %v866 = vunpack.c.l.s4 1983009808
    %v867 = vunpack.c.0.s8 %v866
    %v868 = vlaneseq
    %v869 = vshrl.u32 %v868, 7
    %v870 = vsub.s32 %v867, %v869
    %v871 = vrot.slane %v765, %v870
    %872 = vrot.lane.b32.xlu0 %v871, 64
    %v873 = vpop.permute.xlu0 %872
    %v875 = vmul.f32 %v857, %v873
    %v876 = vmul.f32 %v857, %v863
    %878 = vrot.lane.b32.xlu0 %v876, 64
    %v879 = vpop.permute.xlu0 %878
    %v881 = vadd.f32 %v875, %v879
    %v882 = vtanh.pop %v881
    %v884 = vrot.slane %v857, 2
    %887 = vrot.lane.b32.xlu0 %v882, 64
    %v888 = vpop.permute.xlu0 %887
    %v890 = vmul.f32 %v884, %v888
    %vm891 = vcmp.gt.f32.partialorder %v200, 0.0
    %v892 = vsel %vm891, %v890, %v753
    %v895 = vunpack.c.l.s4 1983009808
    %v896 = vunpack.c.0.s8 %v895
    %v897 = vlaneseq
    %v898 = vshrl.u32 %v897, 7
    %v899 = vsub.s32 %v896, %v898
    %v900 = vrot.slane %v881, %v899
    %901 = vrot.lane.b32.xlu0 %v900, 64
    %v902 = vpop.permute.xlu0 %901
    %v904 = vsel %vm891, %v902, %v765
    %v906 = vsel %vm220, %v892, 0
    %908 = vmatprep.subr.mxu0 0.0
    %909 = vmatpush1.msra.mxu0 0.0
    %910 = vmatprep.subr.mxu0 0.0
    %911 = vmatpush1.msra.mxu0 0.0
    %912 = vmatprep.subr.mxu0 0.0
    %913 = vmatpush1.msra.mxu0 0.0
    %914 = vmatprep.subr.mxu0 0.0
    %915 = vmatpush1.msra.mxu0 0.0
    %916 = vmatprep.subr.mxu0 0.0
    %917 = vmatpush1.msra.mxu0 0.0
    %918 = vmatprep.subr.mxu0 0.0
    %919 = vmatpush1.msra.mxu0 0.0
    %920 = vmatprep.subr.mxu0 0.0
    %921 = vmatpush1.msra.mxu0 0.0
    %922 = vmatprep.subr.mxu0 0.0
    %923 = vmatpush1.msra.mxu0 0.0
    %924 = vmatprep.subr.mxu0 %v219
    %925 = vmatpush1.msra.mxu0 %v218
    %926 = vmatprep.subr.mxu0 %v217
    %927 = vmatpush1.msra.mxu0 %v216
    %928 = vmatprep.subr.mxu0 %v215
    %929 = vmatpush1.msra.mxu0 %v214
    %930 = vmatprep.subr.mxu0 %v213
    %931 = vmatpush1.msra.mxu0 %v212
    %932 = vmatprep.subr.mxu0 %v211
    %933 = vmatpush1.msra.mxu0 %v210
    %934 = vmatprep.subr.mxu0 %v209
    %935 = vmatpush1.msra.mxu0 %v208
    %936 = vmatprep.subr.mxu0 %v207
    %937 = vmatpush1.msra.mxu0 %v206
    %938 = vmatprep.subr.mxu0 %v205
    %939 = vmatpush1.msra.mxu0 %v204
    %940 = vmatprep.subr.mxu0 0.0
    %941 = vmatpush2.msra.mxu0 0.0
    %942 = vmatprep.subr.mxu0 0.0
    %943 = vmatpush2.msra.mxu0 0.0
    %944 = vmatprep.subr.mxu0 0.0
    %945 = vmatpush2.msra.mxu0 0.0
    %946 = vmatprep.subr.mxu0 0.0
    %947 = vmatpush2.msra.mxu0 0.0
    %948 = vmatprep.subr.mxu0 0.0
    %949 = vmatpush2.msra.mxu0 0.0
    %950 = vmatprep.subr.mxu0 0.0
    %951 = vmatpush2.msra.mxu0 0.0
    %952 = vmatprep.subr.mxu0 0.0
    %953 = vmatpush2.msra.mxu0 0.0
    %954 = vmatprep.subr.mxu0 0.0
    %955 = vmatpush2.msra.mxu0 0.0
    %956 = vmatprep.subr.mxu0 0.0
    %957 = vmatpush2.msra.mxu0 0.0
    %958 = vmatprep.subr.mxu0 0.0
    %959 = vmatpush2.msra.mxu0 0.0
    %960 = vmatprep.subr.mxu0 0.0
    %961 = vmatpush2.msra.mxu0 0.0
    %962 = vmatprep.subr.mxu0 0.0
    %963 = vmatpush2.msra.mxu0 0.0
    %964 = vmatprep.subr.mxu0 0.0
    %965 = vmatpush2.msra.mxu0 0.0
    %966 = vmatprep.subr.mxu0 0.0
    %967 = vmatpush2.msra.mxu0 0.0
    %968 = vmatprep.subr.mxu0 0.0
    %969 = vmatpush2.msra.mxu0 0.0
    %970 = vmatprep.subr.mxu0 0.0
    %971 = vmatpush2.msra.mxu0 0.0
    %972 = vmatprep.mubr.f32.mxu0 0.0
    %973 = vmatmul.mubr.f32.gmra.mxu0 %v906
    %v974 = vpop.f32.mrf.mxu0
    %v975 = vadd.f32 0.0, %v974
    %v976 = vpop.f32.mrf.mxu0
    %v977 = vadd.f32 0.0, %v976
    %978 = vdwg.mxu0
    %v981 = vcombine.low %v975, %v977
    %v983 = vunpack.c.l.s4 1983009808
    %v984 = vunpack.c.0.s8 %v983
    %v985 = vlaneseq
    %v986 = vshrl.u32 %v985, 7
    %v987 = vsub.s32 %v984, %v986
    %v988 = vrot.slane %v981, %v987
    %v990 = vadd.f32 %v186, %v988
    %v991 = vxor.u32 %v990, 2147483648
    %v992 = vmul.f32 %v991, 1.442695
    %v993 = vpow.pop %v992
    %v994 = vadd.f32 %v993, 1.0
    %v995 = vrcp.pop %v994
    %v996 = vmul.f32 1.0, %v995
    %998 = vrot.lane.b32.xlu0 %v990, 64
    %v999 = vpop.permute.xlu0 %998
    %v1000 = vrot.slane %v999, 2
    %v1002 = vtanh.pop %v1000
    %v1005 = vunpack.c.l.s4 1983009808
    %v1006 = vunpack.c.0.s8 %v1005
    %v1007 = vlaneseq
    %v1008 = vshrl.u32 %v1007, 7
    %v1009 = vsub.s32 %v1006, %v1008
    %v1010 = vrot.slane %v904, %v1009
    %1011 = vrot.lane.b32.xlu0 %v1010, 64
    %v1012 = vpop.permute.xlu0 %1011
    %v1014 = vmul.f32 %v996, %v1012
    %v1015 = vmul.f32 %v996, %v1002
    %1017 = vrot.lane.b32.xlu0 %v1015, 64
    %v1018 = vpop.permute.xlu0 %1017
    %v1020 = vadd.f32 %v1014, %v1018
    %v1021 = vtanh.pop %v1020
    %v1023 = vrot.slane %v996, 2
    %1026 = vrot.lane.b32.xlu0 %v1021, 64
    %v1027 = vpop.permute.xlu0 %1026
    %v1029 = vmul.f32 %v1023, %v1027
    %vm1030 = vcmp.gt.f32.partialorder %v201, 0.0
    %v1031 = vsel %vm1030, %v1029, %v892
    %v1034 = vunpack.c.l.s4 1983009808
    %v1035 = vunpack.c.0.s8 %v1034
    %v1036 = vlaneseq
    %v1037 = vshrl.u32 %v1036, 7
    %v1038 = vsub.s32 %v1035, %v1037
    %v1039 = vrot.slane %v1020, %v1038
    %1040 = vrot.lane.b32.xlu0 %v1039, 64
    %v1041 = vpop.permute.xlu0 %1040
    %v1043 = vsel %vm1030, %v1041, %v904
    %v1045 = vsel %vm220, %v1031, 0
    %1047 = vmatprep.subr.mxu0 0.0
    %1048 = vmatpush1.msra.mxu0 0.0
    %1049 = vmatprep.subr.mxu0 0.0
    %1050 = vmatpush1.msra.mxu0 0.0
    %1051 = vmatprep.subr.mxu0 0.0
    %1052 = vmatpush1.msra.mxu0 0.0
    %1053 = vmatprep.subr.mxu0 0.0
    %1054 = vmatpush1.msra.mxu0 0.0
    %1055 = vmatprep.subr.mxu0 0.0
    %1056 = vmatpush1.msra.mxu0 0.0
    %1057 = vmatprep.subr.mxu0 0.0
    %1058 = vmatpush1.msra.mxu0 0.0
    %1059 = vmatprep.subr.mxu0 0.0
    %1060 = vmatpush1.msra.mxu0 0.0
    %1061 = vmatprep.subr.mxu0 0.0
    %1062 = vmatpush1.msra.mxu0 0.0
    %1063 = vmatprep.subr.mxu0 %v219
    %1064 = vmatpush1.msra.mxu0 %v218
    %1065 = vmatprep.subr.mxu0 %v217
    %1066 = vmatpush1.msra.mxu0 %v216
    %1067 = vmatprep.subr.mxu0 %v215
    %1068 = vmatpush1.msra.mxu0 %v214
    %1069 = vmatprep.subr.mxu0 %v213
    %1070 = vmatpush1.msra.mxu0 %v212
    %1071 = vmatprep.subr.mxu0 %v211
    %1072 = vmatpush1.msra.mxu0 %v210
    %1073 = vmatprep.subr.mxu0 %v209
    %1074 = vmatpush1.msra.mxu0 %v208
    %1075 = vmatprep.subr.mxu0 %v207
    %1076 = vmatpush1.msra.mxu0 %v206
    %1077 = vmatprep.subr.mxu0 %v205
    %1078 = vmatpush1.msra.mxu0 %v204
    %1079 = vmatprep.subr.mxu0 0.0
    %1080 = vmatpush2.msra.mxu0 0.0
    %1081 = vmatprep.subr.mxu0 0.0
    %1082 = vmatpush2.msra.mxu0 0.0
    %1083 = vmatprep.subr.mxu0 0.0
    %1084 = vmatpush2.msra.mxu0 0.0
    %1085 = vmatprep.subr.mxu0 0.0
    %1086 = vmatpush2.msra.mxu0 0.0
    %1087 = vmatprep.subr.mxu0 0.0
    %1088 = vmatpush2.msra.mxu0 0.0
    %1089 = vmatprep.subr.mxu0 0.0
    %1090 = vmatpush2.msra.mxu0 0.0
    %1091 = vmatprep.subr.mxu0 0.0
    %1092 = vmatpush2.msra.mxu0 0.0
    %1093 = vmatprep.subr.mxu0 0.0
    %1094 = vmatpush2.msra.mxu0 0.0
    %1095 = vmatprep.subr.mxu0 0.0
    %1096 = vmatpush2.msra.mxu0 0.0
    %1097 = vmatprep.subr.mxu0 0.0
    %1098 = vmatpush2.msra.mxu0 0.0
    %1099 = vmatprep.subr.mxu0 0.0
    %1100 = vmatpush2.msra.mxu0 0.0
    %1101 = vmatprep.subr.mxu0 0.0
    %1102 = vmatpush2.msra.mxu0 0.0
    %1103 = vmatprep.subr.mxu0 0.0
    %1104 = vmatpush2.msra.mxu0 0.0
    %1105 = vmatprep.subr.mxu0 0.0
    %1106 = vmatpush2.msra.mxu0 0.0
    %1107 = vmatprep.subr.mxu0 0.0
    %1108 = vmatpush2.msra.mxu0 0.0
    %1109 = vmatprep.subr.mxu0 0.0
    %1110 = vmatpush2.msra.mxu0 0.0
    %1111 = vmatprep.mubr.f32.mxu0 0.0
    %1112 = vmatmul.mubr.f32.gmra.mxu0 %v1045
    %v1113 = vpop.f32.mrf.mxu0
    %v1114 = vadd.f32 0.0, %v1113
    %v1115 = vpop.f32.mrf.mxu0
    %v1116 = vadd.f32 0.0, %v1115
    %1117 = vdwg.mxu0
    %v1120 = vcombine.low %v1114, %v1116
    %v1122 = vunpack.c.l.s4 1983009808
    %v1123 = vunpack.c.0.s8 %v1122
    %v1124 = vlaneseq
    %v1125 = vshrl.u32 %v1124, 7
    %v1126 = vsub.s32 %v1123, %v1125
    %v1127 = vrot.slane %v1120, %v1126
    %v1129 = vadd.f32 %v185, %v1127
    %v1130 = vxor.u32 %v1129, 2147483648
    %v1131 = vmul.f32 %v1130, 1.442695
    %v1132 = vpow.pop %v1131
    %v1133 = vadd.f32 %v1132, 1.0
    %v1134 = vrcp.pop %v1133
    %v1135 = vmul.f32 1.0, %v1134
    %1137 = vrot.lane.b32.xlu0 %v1129, 64
    %v1138 = vpop.permute.xlu0 %1137
    %v1139 = vrot.slane %v1138, 2
    %v1141 = vtanh.pop %v1139
    %v1144 = vunpack.c.l.s4 1983009808
    %v1145 = vunpack.c.0.s8 %v1144
    %v1146 = vlaneseq
    %v1147 = vshrl.u32 %v1146, 7
    %v1148 = vsub.s32 %v1145, %v1147
    %v1149 = vrot.slane %v1043, %v1148
    %1150 = vrot.lane.b32.xlu0 %v1149, 64
    %v1151 = vpop.permute.xlu0 %1150
    %v1153 = vmul.f32 %v1135, %v1151
    %v1154 = vmul.f32 %v1135, %v1141
    %1156 = vrot.lane.b32.xlu0 %v1154, 64
    %v1157 = vpop.permute.xlu0 %1156
    %v1159 = vadd.f32 %v1153, %v1157
    %v1160 = vtanh.pop %v1159
    %v1162 = vrot.slane %v1135, 2
    %1165 = vrot.lane.b32.xlu0 %v1160, 64
    %v1166 = vpop.permute.xlu0 %1165
    %v1168 = vmul.f32 %v1162, %v1166
    %vm1169 = vcmp.gt.f32.partialorder %v202, 0.0
    %v1170 = vsel %vm1169, %v1168, %v1031
    %v1173 = vunpack.c.l.s4 1983009808
    %v1174 = vunpack.c.0.s8 %v1173
    %v1175 = vlaneseq
    %v1176 = vshrl.u32 %v1175, 7
    %v1177 = vsub.s32 %v1174, %v1176
    %v1178 = vrot.slane %v1159, %v1177
    %1179 = vrot.lane.b32.xlu0 %v1178, 64
    %v1180 = vpop.permute.xlu0 %1179
    %v1182 = vsel %vm1169, %v1180, %v1043
    %v1184 = vsel %vm220, %v1170, 0
    %1186 = vmatprep.subr.mxu0 0.0
    %1187 = vmatpush1.msra.mxu0 0.0
    %1188 = vmatprep.subr.mxu0 0.0
    %1189 = vmatpush1.msra.mxu0 0.0
    %1190 = vmatprep.subr.mxu0 0.0
    %1191 = vmatpush1.msra.mxu0 0.0
    %1192 = vmatprep.subr.mxu0 0.0
    %1193 = vmatpush1.msra.mxu0 0.0
    %1194 = vmatprep.subr.mxu0 0.0
    %1195 = vmatpush1.msra.mxu0 0.0
    %1196 = vmatprep.subr.mxu0 0.0
    %1197 = vmatpush1.msra.mxu0 0.0
    %1198 = vmatprep.subr.mxu0 0.0
    %1199 = vmatpush1.msra.mxu0 0.0
    %1200 = vmatprep.subr.mxu0 0.0
    %1201 = vmatpush1.msra.mxu0 0.0
    %1202 = vmatprep.subr.mxu0 %v219
    %1203 = vmatpush1.msra.mxu0 %v218
    %1204 = vmatprep.subr.mxu0 %v217
    %1205 = vmatpush1.msra.mxu0 %v216
    %1206 = vmatprep.subr.mxu0 %v215
    %1207 = vmatpush1.msra.mxu0 %v214
    %1208 = vmatprep.subr.mxu0 %v213
    %1209 = vmatpush1.msra.mxu0 %v212
    %1210 = vmatprep.subr.mxu0 %v211
    %1211 = vmatpush1.msra.mxu0 %v210
    %1212 = vmatprep.subr.mxu0 %v209
    %1213 = vmatpush1.msra.mxu0 %v208
    %1214 = vmatprep.subr.mxu0 %v207
    %1215 = vmatpush1.msra.mxu0 %v206
    %1216 = vmatprep.subr.mxu0 %v205
    %1217 = vmatpush1.msra.mxu0 %v204
    %1218 = vmatprep.subr.mxu0 0.0
    %1219 = vmatpush2.msra.mxu0 0.0
    %1220 = vmatprep.subr.mxu0 0.0
    %1221 = vmatpush2.msra.mxu0 0.0
    %1222 = vmatprep.subr.mxu0 0.0
    %1223 = vmatpush2.msra.mxu0 0.0
    %1224 = vmatprep.subr.mxu0 0.0
    %1225 = vmatpush2.msra.mxu0 0.0
    %1226 = vmatprep.subr.mxu0 0.0
    %1227 = vmatpush2.msra.mxu0 0.0
    %1228 = vmatprep.subr.mxu0 0.0
    %1229 = vmatpush2.msra.mxu0 0.0
    %1230 = vmatprep.subr.mxu0 0.0
    %1231 = vmatpush2.msra.mxu0 0.0
    %1232 = vmatprep.subr.mxu0 0.0
    %1233 = vmatpush2.msra.mxu0 0.0
    %1234 = vmatprep.subr.mxu0 0.0
    %1235 = vmatpush2.msra.mxu0 0.0
    %1236 = vmatprep.subr.mxu0 0.0
    %1237 = vmatpush2.msra.mxu0 0.0
    %1238 = vmatprep.subr.mxu0 0.0
    %1239 = vmatpush2.msra.mxu0 0.0
    %1240 = vmatprep.subr.mxu0 0.0
    %1241 = vmatpush2.msra.mxu0 0.0
    %1242 = vmatprep.subr.mxu0 0.0
    %1243 = vmatpush2.msra.mxu0 0.0
    %1244 = vmatprep.subr.mxu0 0.0
    %1245 = vmatpush2.msra.mxu0 0.0
    %1246 = vmatprep.subr.mxu0 0.0
    %1247 = vmatpush2.msra.mxu0 0.0
    %1248 = vmatprep.subr.mxu0 0.0
    %1249 = vmatpush2.msra.mxu0 0.0
    %1250 = vmatprep.mubr.f32.mxu0 0.0
    %1251 = vmatmul.mubr.f32.gmra.mxu0 %v1184
    %v1252 = vpop.f32.mrf.mxu0
    %v1253 = vadd.f32 0.0, %v1252
    %v1254 = vpop.f32.mrf.mxu0
    %v1255 = vadd.f32 0.0, %v1254
    %1256 = vdwg.mxu0
    %v1259 = vcombine.low %v1253, %v1255
    %v1261 = vunpack.c.l.s4 1983009808
    %v1262 = vunpack.c.0.s8 %v1261
    %v1263 = vlaneseq
    %v1264 = vshrl.u32 %v1263, 7
    %v1265 = vsub.s32 %v1262, %v1264
    %v1266 = vrot.slane %v1259, %v1265
    %v1268 = vadd.f32 %v187, %v1266
    %v1269 = vxor.u32 %v1268, 2147483648
    %v1270 = vmul.f32 %v1269, 1.442695
    %v1271 = vpow.pop %v1270
    %v1272 = vadd.f32 %v1271, 1.0
    %v1273 = vrcp.pop %v1272
    %v1274 = vmul.f32 1.0, %v1273
    %1276 = vrot.lane.b32.xlu0 %v1268, 64
    %v1277 = vpop.permute.xlu0 %1276
    %v1278 = vrot.slane %v1277, 2
    %v1280 = vtanh.pop %v1278
    %v1283 = vunpack.c.l.s4 1983009808
    %v1284 = vunpack.c.0.s8 %v1283
    %v1285 = vlaneseq
    %v1286 = vshrl.u32 %v1285, 7
    %v1287 = vsub.s32 %v1284, %v1286
    %v1288 = vrot.slane %v1182, %v1287
    %1289 = vrot.lane.b32.xlu0 %v1288, 64
    %v1290 = vpop.permute.xlu0 %1289
    %v1292 = vmul.f32 %v1274, %v1290
    %v1293 = vmul.f32 %v1274, %v1280
    %1295 = vrot.lane.b32.xlu0 %v1293, 64
    %v1296 = vpop.permute.xlu0 %1295
    %v1298 = vadd.f32 %v1292, %v1296
    %v1299 = vtanh.pop %v1298
    %v1301 = vrot.slane %v1274, 2
    %1304 = vrot.lane.b32.xlu0 %v1299, 64
    %v1305 = vpop.permute.xlu0 %1304
    %v1307 = vmul.f32 %v1301, %v1305
    %vm1308 = vcmp.gt.f32.partialorder %v203, 0.0
    %v1309 = vsel %vm1308, %v1307, %v1170
    %v1310 = vld [vmem:[%s5] sm:$0xff]
    %v1311 = vld [vmem:[%s5 + $0x8] sm:$0xff]
    %v1312 = vld [vmem:[%s5 + $0x10] sm:$0xff]
    %v1313 = vld [vmem:[%s5 + $0x18] sm:$0xff]
    %v1314 = vld [vmem:[%s5 + $0x20] sm:$0xff]
    %v1315 = vld [vmem:[%s5 + $0x28] sm:$0xff]
    %v1316 = vld [vmem:[%s5 + $0x30] sm:$0xff]
    %v1317 = vld [vmem:[%s5 + $0x38] sm:$0xff]
    %v1318 = vld [vmem:[%s6] sm:$0x1]
    %v1320 = vlaneseq
    %v1321 = vshrl.u32 %v1320, 7
    %v1322 = vsub.s32 0, %v1321
    %v1323 = vrot.slane %v1318, %v1322
    %v1326 = vsel %vm220, %v1309, 0
    %1328 = vmatprep.subr.mxu0 0.0
    %1329 = vmatpush1.msra.mxu0 0.0
    %1330 = vmatprep.subr.mxu0 0.0
    %1331 = vmatpush1.msra.mxu0 0.0
    %1332 = vmatprep.subr.mxu0 0.0
    %1333 = vmatpush1.msra.mxu0 0.0
    %1334 = vmatprep.subr.mxu0 0.0
    %1335 = vmatpush1.msra.mxu0 0.0
    %1336 = vmatprep.subr.mxu0 0.0
    %1337 = vmatpush1.msra.mxu0 0.0
    %1338 = vmatprep.subr.mxu0 0.0
    %1339 = vmatpush1.msra.mxu0 0.0
    %1340 = vmatprep.subr.mxu0 0.0
    %1341 = vmatpush1.msra.mxu0 0.0
    %1342 = vmatprep.subr.mxu0 0.0
    %1343 = vmatpush1.msra.mxu0 0.0
    %1344 = vmatprep.subr.mxu0 0.0
    %1345 = vmatpush1.msra.mxu0 %v1317
    %1346 = vmatprep.subr.mxu0 0.0
    %1347 = vmatpush1.msra.mxu0 %v1316
    %1348 = vmatprep.subr.mxu0 0.0
    %1349 = vmatpush1.msra.mxu0 %v1315
    %1350 = vmatprep.subr.mxu0 0.0
    %1351 = vmatpush1.msra.mxu0 %v1314
    %1352 = vmatprep.subr.mxu0 0.0
    %1353 = vmatpush1.msra.mxu0 %v1313
    %1354 = vmatprep.subr.mxu0 0.0
    %1355 = vmatpush1.msra.mxu0 %v1312
    %1356 = vmatprep.subr.mxu0 0.0
    %1357 = vmatpush1.msra.mxu0 %v1311
    %1358 = vmatprep.subr.mxu0 0.0
    %1359 = vmatpush1.msra.mxu0 %v1310
    %1360 = vmatprep.subr.mxu0 0.0
    %1361 = vmatpush2.msra.mxu0 0.0
    %1362 = vmatprep.subr.mxu0 0.0
    %1363 = vmatpush2.msra.mxu0 0.0
    %1364 = vmatprep.subr.mxu0 0.0
    %1365 = vmatpush2.msra.mxu0 0.0
    %1366 = vmatprep.subr.mxu0 0.0
    %1367 = vmatpush2.msra.mxu0 0.0
    %1368 = vmatprep.subr.mxu0 0.0
    %1369 = vmatpush2.msra.mxu0 0.0
    %1370 = vmatprep.subr.mxu0 0.0
    %1371 = vmatpush2.msra.mxu0 0.0
    %1372 = vmatprep.subr.mxu0 0.0
    %1373 = vmatpush2.msra.mxu0 0.0
    %1374 = vmatprep.subr.mxu0 0.0
    %1375 = vmatpush2.msra.mxu0 0.0
    %1376 = vmatprep.subr.mxu0 0.0
    %1377 = vmatpush2.msra.mxu0 0.0
    %1378 = vmatprep.subr.mxu0 0.0
    %1379 = vmatpush2.msra.mxu0 0.0
    %1380 = vmatprep.subr.mxu0 0.0
    %1381 = vmatpush2.msra.mxu0 0.0
    %1382 = vmatprep.subr.mxu0 0.0
    %1383 = vmatpush2.msra.mxu0 0.0
    %1384 = vmatprep.subr.mxu0 0.0
    %1385 = vmatpush2.msra.mxu0 0.0
    %1386 = vmatprep.subr.mxu0 0.0
    %1387 = vmatpush2.msra.mxu0 0.0
    %1388 = vmatprep.subr.mxu0 0.0
    %1389 = vmatpush2.msra.mxu0 0.0
    %1390 = vmatprep.subr.mxu0 0.0
    %1391 = vmatpush2.msra.mxu0 0.0
    %1392 = vmatprep.mubr.f32.mxu0 0.0
    %1393 = vmatmul.mubr.f32.gmra.mxu0 %v1326
    %v1394 = vpop.f32.mrf.mxu0
    %v1395 = vadd.f32 %v1323, %v1394
    %v1396 = vpop.f32.mrf.mxu0
    %1397 = vdwg.mxu0
    %vm1398 = vcmask 58368
    %1399 = vst.msk [vmem:[#allocation2] sm:$0x3] %vm1398, %v1395
    // Predicated region
    $region30: #{bilstm_classify_forward.1} parent=1 // pred_check
      _
    $region31: #{bilstm_classify_forward.1} parent=1 // pred_check_branch
      %1401 = sbr.rel (0) target = $region33
    $region32: #{bilstm_classify_forward.1} parent=1 // pred_region
      %s1403 = ssub.s32 32, 32
      %1404 = vsyncadd [#allocation3], %s1403
      %s1406 = sshll.u32 [#allocation2], 4
      %s1407 = int_to_ptr.vmem [resolvable:$true] %s1406
      %1409 = dma.vmem_to_hbm [thread:$0]  %s1407, 32, %s7, [#allocation3]
    $region33: #{bilstm_classify_forward.1} parent=1 // pred_fallthru
      _
    // Predicated region
    $region34: #{bilstm_classify_forward.1} parent=1 // pred_check
      _
    $region35: #{bilstm_classify_forward.1} parent=1 // pred_check_branch
      %1411 = sbr.rel (0) target = $region37
    $region36: #{bilstm_classify_forward.1} parent=1 // pred_region
      %1412 = dma.done [#allocation3], 32
    $region37: #{bilstm_classify_forward.1} parent=1 // pred_fallthru
      _
    %1413 = vsyncpa [#allocation3], 1

</llo_original>
